<compile_context>
chip_gen: v7x
topology: tpu7x:2x2x1
jax: 0.10.0
libtpu: 0.0.40
codegen_flags: <defaults>
</compile_context>

<pallas_src>
import functools
import math

import jax
import jax.numpy as jnp
from jax.experimental import pallas as pl
from jax.experimental.pallas import tpu as pltpu


# ----------------------------------------------------------------------------
# LayerNorm matching the PyTorch module: torch.std(-1) is Bessel corrected
# (divide by N-1) and eps is added to the *std*, not the variance.
# ----------------------------------------------------------------------------
def _layer_norm_kernel_math(x, a, b, eps):
    d = x.shape[-1]
    mean = jnp.mean(x, axis=-1, keepdims=True)
    diff = x - mean
    var = jnp.sum(diff * diff, axis=-1, keepdims=True) * (1.0 / (d - 1))
    inv = pl.reciprocal(jnp.sqrt(var) + eps, approx=True)   # EUP, ~free
    return a * diff * inv + b


def _layer_norm_ref(x, a, b, eps):
    d = x.shape[-1]
    mean = jnp.mean(x, axis=-1, keepdims=True)
    diff = x - mean
    var = jnp.sum(diff * diff, axis=-1, keepdims=True) / (d - 1)
    return a * diff / (jnp.sqrt(var) + eps) + b


# ----------------------------------------------------------------------------
# Fused whole-encoder kernel.  Grid = (batch, layer); the layer axis is the
# innermost ("arbitrary") axis, the batch axis is "parallel".
# ----------------------------------------------------------------------------
def _encoder_kernel(x_ref, mask_ref,
                    ln1_a, ln1_b, wq, bq, wk, bk, wv, bv, wo, bo,
                    ln2_a, ln2_b, w1, b1, w2, b2,
                    fn_a, fn_b,
                    o_ref,
                    x_state,
                    *, h, eps):
    layer = pl.program_id(1)
    n_layers = pl.num_programs(1)

    # Load activations into the VMEM-resident f32 running state once per batch
    # block; all subsequent layers read/write the scratch (no HBM round trip).
    @pl.when(layer == 0)
    def _():
        x_state[...] = x_ref[0].astype(jnp.float32)

    x = x_state[...]                                   # (S, D) f32
    S, D = x.shape
    d_k = D // h
    scale = 1.0 / math.sqrt(d_k)

    # Additive key-mask bias, built once (hoisted out of all head processing).
    bias = jnp.where(mask_ref[0] > 0.0,
                     jnp.float32(-1e9), jnp.float32(0.0))  # (1, S)

    # ---- sublayer 0: pre-norm multi-head self-attention + residual ---------
    xn = _layer_norm_kernel_math(x, ln1_a[0], ln1_b[0], eps)
    xn_b = xn.astype(jnp.bfloat16)
    # Wide QKV projections: bf16 operands, f32 accumulation (MXU-friendly).
    q = jnp.dot(xn_b, wq[0], preferred_element_type=jnp.float32) + bq[0]
    k = jnp.dot(xn_b, wk[0], preferred_element_type=jnp.float32) + bk[0]
    v = jnp.dot(xn_b, wv[0], preferred_element_type=jnp.float32) + bv[0]
    q = q * scale                                      # fold 1/sqrt(d_k) once

    # Head-batched layout (h, S, d_k) — one batched MXU call per step instead
    # of h tiny per-head matmuls.
    qh = jnp.stack([q[:, i * d_k:(i + 1) * d_k] for i in range(h)],
                   axis=0).astype(jnp.bfloat16)
    kh = jnp.stack([k[:, i * d_k:(i + 1) * d_k] for i in range(h)],
                   axis=0).astype(jnp.bfloat16)
    vh = jnp.stack([v[:, i * d_k:(i + 1) * d_k] for i in range(h)],
                   axis=0).astype(jnp.bfloat16)

    scores = jnp.einsum('hqd,hkd->hqk', qh, kh,
                        preferred_element_type=jnp.float32)      # (h, S, S)
    scores = scores + bias[None]                     # broadcast over heads, q
    scores = scores - jnp.max(scores, axis=-1, keepdims=True)
    p = jnp.exp(scores)                              # f32 softmax
    p = p * pl.reciprocal(jnp.sum(p, axis=-1, keepdims=True), approx=True)
    ctx = jnp.einsum('hqk,hkd->hqd', p.astype(jnp.bfloat16), vh,
                     preferred_element_type=jnp.float32)         # (h, S, d_k)

    # Re-pack heads and run a single wide output projection on the MXU.
    ctx_flat = jnp.concatenate([ctx[i] for i in range(h)], axis=-1)  # (S, D)
    attn = jnp.dot(ctx_flat.astype(jnp.bfloat16), wo[0],
                   preferred_element_type=jnp.float32) + bo[0]
    x = x + attn                                     # residual (dropout = id)

    # ---- sublayer 1: pre-norm feed-forward + residual -----------------------
    # NOTE: the reference FFN has NO nonlinearity: w2(dropout(w1(x))).
    xn2 = _layer_norm_kernel_math(x, ln2_a[0], ln2_b[0], eps)
    hid = jnp.dot(xn2.astype(jnp.bfloat16), w1[0],
                  preferred_element_type=jnp.float32) + b1[0]
    ff = jnp.dot(hid.astype(jnp.bfloat16), w2[0],
                 preferred_element_type=jnp.float32) + b2[0]
    x = x + ff

    x_state[...] = x

    # Encoder's trailing LayerNorm, fused into the last layer step.
    @pl.when(layer == n_layers - 1)
    def _():
        y = _layer_norm_kernel_math(x, fn_a[...], fn_b[...], eps)
        o_ref[0] = y.astype(o_ref.dtype)


# ----------------------------------------------------------------------------
# Wrapper
# ----------------------------------------------------------------------------
_LAYER_KEYS = ("ln1_a", "ln1_b", "wq", "bq", "wk", "bk", "wv", "bv",
               "wo", "bo", "ln2_a", "ln2_b", "w1", "b1", "w2", "b2")
_BF16_KEYS = frozenset({"wq", "wk", "wv", "wo", "w1", "w2"})


def encoder_forward(x, key_mask, layer_params, final_a, final_b, *, h, eps=1e-6):
    """x: (B,S,D) f32; key_mask: (B,S) bool/int — True/nonzero == masked key."""
    B, S, D = x.shape
    n_layers = len(layer_params)

    # Compact mask: (B, 1, S) float32, O(S) per grid step instead of O(S^2).
    mask_f = key_mask.astype(jnp.float32).reshape(B, 1, S)

    # Stack per-layer weights along a leading layer axis; matmul weights bf16.
    stacked = []
    for key in _LAYER_KEYS:
        arr = jnp.stack([p[key] for p in layer_params], axis=0)
        if key in _BF16_KEYS:
            arr = arr.astype(jnp.bfloat16)
        stacked.append(arr)

    fa = final_a.astype(jnp.float32)
    fb = final_b.astype(jnp.float32)

    def layer_spec(arr):
        zeros = (0,) * (arr.ndim - 1)
        return pl.BlockSpec((1,) + arr.shape[1:], lambda b, l: (l,) + zeros)

    def const_spec(arr):
        zeros = (0,) * arr.ndim
        return pl.BlockSpec(arr.shape, lambda b, l: zeros)

    kernel = functools.partial(_encoder_kernel, h=h, eps=eps)

    return pl.pallas_call(
        kernel,
        out_shape=jax.ShapeDtypeStruct((B, S, D), x.dtype),
        grid_spec=pltpu.PrefetchScalarGridSpec(
            num_scalar_prefetch=0,
            grid=(B, n_layers),
            in_specs=[pl.BlockSpec((1, S, D), lambda b, l: (b, 0, 0)),   # x
                      pl.BlockSpec((1, 1, S), lambda b, l: (b, 0, 0))]   # mask
                     + [layer_spec(w) for w in stacked]
                     + [const_spec(fa), const_spec(fb)],
            out_specs=pl.BlockSpec((1, S, D), lambda b, l: (b, 0, 0)),
            scratch_shapes=[pltpu.VMEM((S, D), jnp.float32)],  # resident acts
        ),
        compiler_params=pltpu.CompilerParams(
            dimension_semantics=("parallel", "arbitrary"),
            vmem_limit_bytes=64 * 1024 * 1024,
        ),
    )(x, mask_f, *stacked, fa, fb)


# ----------------------------------------------------------------------------
# Pure-JAX f32 reference (intended semantics of the PyTorch module, eval mode).
# ----------------------------------------------------------------------------
def _encoder_ref(x, mask, layer_params, final_a, final_b, *, h, eps=1e-6):
    B, S, D = x.shape
    d_k = D // h
    m = mask[:, None, :, :]                  # (B, 1, S, S), broadcast over heads
    for p in layer_params:
        xn = _layer_norm_ref(x, p["ln1_a"], p["ln1_b"], eps)
        q = xn @ p["wq"] + p["bq"]
        k = xn @ p["wk"] + p["bk"]
        v = xn @ p["wv"] + p["bv"]

        def split(t):
            return t.reshape(B, S, h, d_k).transpose(0, 2, 1, 3)

        qh, kh, vh = split(q), split(k), split(v)
        scores = jnp.einsum("bhqd,bhkd->bhqk", qh, kh) / math.sqrt(d_k)
        scores = jnp.where(m, -1e9, scores)
        attn = jax.nn.softmax(scores, axis=-1)
        ctx = jnp.einsum("bhqk,bhkd->bhqd", attn, vh)
        ctx = ctx.transpose(0, 2, 1, 3).reshape(B, S, D)
        x = x + (ctx @ p["wo"] + p["bo"])
        xn2 = _layer_norm_ref(x, p["ln2_a"], p["ln2_b"], eps)
        x = x + ((xn2 @ p["w1"] + p["b1"]) @ p["w2"] + p["b2"])
    return _layer_norm_ref(x, final_a, final_b, eps)


def _init_layer(key, d_model, ff_model):
    ks = jax.random.split(key, 16)

    def lin(k, fan_in, shape):
        return jax.random.normal(k, shape, jnp.float32) / math.sqrt(fan_in)

    def vec(k, n):
        return 0.1 * jax.random.normal(k, (1, n), jnp.float32)

    return {
        "ln1_a": 1.0 + vec(ks[0], d_model),
        "ln1_b": vec(ks[1], d_model),
        "wq": lin(ks[2], d_model, (d_model, d_model)), "bq": vec(ks[3], d_model),
        "wk": lin(ks[4], d_model, (d_model, d_model)), "bk": vec(ks[5], d_model),
        "wv": lin(ks[6], d_model, (d_model, d_model)), "bv": vec(ks[7], d_model),
        "wo": lin(ks[8], d_model, (d_model, d_model)), "bo": vec(ks[9], d_model),
        "ln2_a": 1.0 + vec(ks[10], d_model),
        "ln2_b": vec(ks[11], d_model),
        "w1": lin(ks[12], d_model, (d_model, ff_model)), "b1": vec(ks[13], ff_model),
        "w2": lin(ks[14], ff_model, (ff_model, d_model)), "b2": vec(ks[15], d_model),
    }


if __name__ == "__main__":
    # Small shapes consistent with the module: batch=2, seq=8, d_model=32,
    # heads=4, ff_model=64, N=2 layers.
    B, S, D, H, FF, N = 2, 8, 32, 4, 64, 2
    EPS = 1e-6

    root = jax.random.PRNGKey(0)
    kx, kp, kf = jax.random.split(root, 3)

    x = jax.random.normal(kx, (B, S, D), dtype=jnp.float32)

    # Padding-style key mask: last 2 key positions of batch element 1 masked.
    key_mask = jnp.zeros((B, S), dtype=bool).at[1, S - 2:].set(True)

    layer_keys = jax.random.split(kp, N)
    layers = [_init_layer(k, D, FF) for k in layer_keys]
    kf1, kf2 = jax.random.split(kf)
    final_a = 1.0 + 0.1 * jax.random.normal(kf1, (1, D), jnp.float32)
    final_b = 0.1 * jax.random.normal(kf2, (1, D), jnp.float32)

    out = encoder_forward(x, key_mask, layers, final_a, final_b, h=H, eps=EPS)
    out = jax.block_until_ready(out)

    full_mask = jnp.broadcast_to(key_mask[:, None, :], (B, S, S))
    with jax.default_matmul_precision("highest"):
        ref = _encoder_ref(x, full_mask, layers, final_a, final_b, h=H, eps=EPS)
    ref = jax.block_until_ready(ref)

    assert out.shape == (B, S, D), out.shape
    assert bool(jnp.all(jnp.isfinite(out))), "non-finite output"
    max_err = float(jnp.max(jnp.abs(out - ref)))
    # Tolerance loosened for bf16 matmul operands + approx reciprocal.
    assert jnp.allclose(out, ref, atol=5e-2, rtol=5e-2), f"mismatch: {max_err}"

    print("KERNEL_OK")
</pallas_src>

<mosaic_0001>
module attributes {stable_mosaic.version = 11 : i64} {
  func.func @_encoder_kernel(%arg0: i32, %arg1: i32, %arg2: memref<1x8x32xf32, #tpu.memory_space<vmem>>, %arg3: memref<1x1x8xf32, #tpu.memory_space<vmem>>, %arg4: memref<1x1x32xf32, #tpu.memory_space<vmem>>, %arg5: memref<1x1x32xf32, #tpu.memory_space<vmem>>, %arg6: memref<1x32x32xbf16, #tpu.memory_space<vmem>>, %arg7: memref<1x1x32xf32, #tpu.memory_space<vmem>>, %arg8: memref<1x32x32xbf16, #tpu.memory_space<vmem>>, %arg9: memref<1x1x32xf32, #tpu.memory_space<vmem>>, %arg10: memref<1x32x32xbf16, #tpu.memory_space<vmem>>, %arg11: memref<1x1x32xf32, #tpu.memory_space<vmem>>, %arg12: memref<1x32x32xbf16, #tpu.memory_space<vmem>>, %arg13: memref<1x1x32xf32, #tpu.memory_space<vmem>>, %arg14: memref<1x1x32xf32, #tpu.memory_space<vmem>>, %arg15: memref<1x1x32xf32, #tpu.memory_space<vmem>>, %arg16: memref<1x32x64xbf16, #tpu.memory_space<vmem>>, %arg17: memref<1x1x64xf32, #tpu.memory_space<vmem>>, %arg18: memref<1x64x32xbf16, #tpu.memory_space<vmem>>, %arg19: memref<1x1x32xf32, #tpu.memory_space<vmem>>, %arg20: memref<1x32xf32, #tpu.memory_space<vmem>>, %arg21: memref<1x32xf32, #tpu.memory_space<vmem>>, %arg22: memref<1x8x32xf32, #tpu.memory_space<vmem>>, %arg23: memref<8x32xf32, #tpu.memory_space<vmem>>) attributes {dimension_semantics = [#tpu.dimension_semantics<parallel>, #tpu.dimension_semantics<arbitrary>], iteration_bounds = array<i64: 2, 2>, scalar_prefetch = 0 : i64, scratch_operands = 1 : i64, tpu.core_type = #tpu.core_type<tc>, window_params = [{transform_indices = @transform_0, window_bounds = array<i64: 1, 8, 32>}, {transform_indices = @transform_1, window_bounds = array<i64: 1, 1, 8>}, {transform_indices = @transform_2, window_bounds = array<i64: 1, 1, 32>}, {transform_indices = @transform_3, window_bounds = array<i64: 1, 1, 32>}, {transform_indices = @transform_4, window_bounds = array<i64: 1, 32, 32>}, {transform_indices = @transform_5, window_bounds = array<i64: 1, 1, 32>}, {transform_indices = @transform_6, window_bounds = array<i64: 1, 32, 32>}, {transform_indices = @transform_7, window_bounds = array<i64: 1, 1, 32>}, {transform_indices = @transform_8, window_bounds = array<i64: 1, 32, 32>}, {transform_indices = @transform_9, window_bounds = array<i64: 1, 1, 32>}, {transform_indices = @transform_10, window_bounds = array<i64: 1, 32, 32>}, {transform_indices = @transform_11, window_bounds = array<i64: 1, 1, 32>}, {transform_indices = @transform_12, window_bounds = array<i64: 1, 1, 32>}, {transform_indices = @transform_13, window_bounds = array<i64: 1, 1, 32>}, {transform_indices = @transform_14, window_bounds = array<i64: 1, 32, 64>}, {transform_indices = @transform_15, window_bounds = array<i64: 1, 1, 64>}, {transform_indices = @transform_16, window_bounds = array<i64: 1, 64, 32>}, {transform_indices = @transform_17, window_bounds = array<i64: 1, 1, 32>}, {pipeline_mode = #tpu.pipeline_mode<synchronous>, transform_indices = @transform_18, window_bounds = array<i64: 1, 32>}, {pipeline_mode = #tpu.pipeline_mode<synchronous>, transform_indices = @transform_19, window_bounds = array<i64: 1, 32>}, {transform_indices = @transform_20, window_bounds = array<i64: 1, 8, 32>}]} {
    %c0_i32 = arith.constant 0 : i32
    %0 = arith.cmpi eq, %arg1, %c0_i32 : i32
    %1 = arith.extui %0 : i1 to i32
    %c0_i32_0 = arith.constant 0 : i32
    %2 = arith.cmpi ne, %1, %c0_i32_0 : i32
    scf.if %2 {
      %c0_79 = arith.constant 0 : index
      %c0_80 = arith.constant 0 : index
      %c0_81 = arith.constant 0 : index
      %170 = vector.load %arg2[%c0_79, %c0_80, %c0_81] : memref<1x8x32xf32, #tpu.memory_space<vmem>>, vector<1x8x32xf32>
      %171 = vector.shape_cast %170 : vector<1x8x32xf32> to vector<8x32xf32>
      %c0_82 = arith.constant 0 : index
      %c0_83 = arith.constant 0 : index
      %172 = vector.load %arg23[%c0_82, %c0_83] : memref<8x32xf32, #tpu.memory_space<vmem>>, vector<8x32xf32>
      tpu.vector_store %arg23[%c0_82, %c0_83], %171 {strides = array<i32>} : memref<8x32xf32, #tpu.memory_space<vmem>>, vector<8x32xf32>,
    } else {
    }
    %c0 = arith.constant 0 : index
    %c0_1 = arith.constant 0 : index
    %3 = vector.load %arg23[%c0, %c0_1] : memref<8x32xf32, #tpu.memory_space<vmem>>, vector<8x32xf32>
    %c0_2 = arith.constant 0 : index
    %c0_3 = arith.constant 0 : index
    %c0_4 = arith.constant 0 : index
    %4 = vector.load %arg3[%c0_2, %c0_3, %c0_4] : memref<1x1x8xf32, #tpu.memory_space<vmem>>, vector<1x1x8xf32>
    %5 = vector.shape_cast %4 : vector<1x1x8xf32> to vector<1x8xf32>
    %cst = arith.constant 0.000000e+00 : f32
    %6 = vector.broadcast %cst : f32 to vector<1x8xf32>
    %7 = arith.cmpf ogt, %5, %6 : vector<1x8xf32>
    %cst_5 = arith.constant -1.000000e+09 : f32
    %cst_6 = arith.constant 0.000000e+00 : f32
    %8 = vector.broadcast %cst_5 : f32 to vector<1x8xf32>
    %9 = vector.broadcast %cst_6 : f32 to vector<1x8xf32>
    %10 = arith.select %7, %8, %9 : vector<1x8xi1>, vector<1x8xf32>
    %c0_7 = arith.constant 0 : index
    %c0_8 = arith.constant 0 : index
    %c0_9 = arith.constant 0 : index
    %11 = vector.load %arg4[%c0_7, %c0_8, %c0_9] : memref<1x1x32xf32, #tpu.memory_space<vmem>>, vector<1x1x32xf32>
    %12 = vector.shape_cast %11 : vector<1x1x32xf32> to vector<1x32xf32>
    %c0_10 = arith.constant 0 : index
    %c0_11 = arith.constant 0 : index
    %c0_12 = arith.constant 0 : index
    %13 = vector.load %arg5[%c0_10, %c0_11, %c0_12] : memref<1x1x32xf32, #tpu.memory_space<vmem>>, vector<1x1x32xf32>
    %14 = vector.shape_cast %13 : vector<1x1x32xf32> to vector<1x32xf32>
    %cst_13 = arith.constant dense<0.000000e+00> : vector<8xf32>
    %15 = vector.multi_reduction <add>, %3, %cst_13 [1] : vector<8x32xf32> to vector<8xf32>
    %16 = vector.shape_cast %15 : vector<8xf32> to vector<8x1xf32>
    %cst_14 = arith.constant 3.200000e+01 : f32
    %17 = vector.broadcast %cst_14 : f32 to vector<8x1xf32>
    %18 = arith.divf %16, %17 : vector<8x1xf32>
    %19 = vector.broadcast %18 : vector<8x1xf32> to vector<8x32xf32>
    %20 = arith.subf %3, %19 : vector<8x32xf32>
    %21 = arith.mulf %20, %20 : vector<8x32xf32>
    %cst_15 = arith.constant dense<0.000000e+00> : vector<8xf32>
    %22 = vector.multi_reduction <add>, %21, %cst_15 [1] : vector<8x32xf32> to vector<8xf32>
    %23 = vector.shape_cast %22 : vector<8xf32> to vector<8x1xf32>
    %cst_16 = arith.constant 0.0322580636 : f32
    %24 = vector.broadcast %cst_16 : f32 to vector<8x1xf32>
    %25 = arith.mulf %23, %24 : vector<8x1xf32>
    %26 = math.sqrt %25 : vector<8x1xf32>
    %cst_17 = arith.constant 9.99999997E-7 : f32
    %27 = vector.broadcast %cst_17 : f32 to vector<8x1xf32>
    %28 = arith.addf %26, %27 : vector<8x1xf32>
    %29 = tpu.reciprocal %28 {approx = true} : vector<8x1xf32> -> vector<8x1xf32>
    %30 = vector.broadcast %12 : vector<1x32xf32> to vector<8x32xf32>
    %31 = arith.mulf %30, %20 : vector<8x32xf32>
    %32 = vector.broadcast %29 : vector<8x1xf32> to vector<8x32xf32>
    %33 = arith.mulf %31, %32 : vector<8x32xf32>
    %34 = vector.broadcast %14 : vector<1x32xf32> to vector<8x32xf32>
    %35 = arith.addf %33, %34 : vector<8x32xf32>
    %36 = arith.truncf %35 : vector<8x32xf32> to vector<8x32xbf16>
    %c0_18 = arith.constant 0 : index
    %c0_19 = arith.constant 0 : index
    %c0_20 = arith.constant 0 : index
    %37 = vector.load %arg6[%c0_18, %c0_19, %c0_20] : memref<1x32x32xbf16, #tpu.memory_space<vmem>>, vector<1x32x32xbf16>
    %38 = vector.shape_cast %37 : vector<1x32x32xbf16> to vector<32x32xbf16>
    %cst_21 = arith.constant dense<0.000000e+00> : vector<8x32xf32>
    %39 = tpu.matmul %36, %38, %cst_21 {dimension_numbers = #tpu.dot_dimension_numbers<[1], [0], [0], [1], [0, 0, 1, 1], [], []>} : vector<8x32xbf16>, vector<32x32xbf16>, vector<8x32xf32> -> vector<8x32xf32>
    %c0_22 = arith.constant 0 : index
    %c0_23 = arith.constant 0 : index
    %c0_24 = arith.constant 0 : index
    %40 = vector.load %arg7[%c0_22, %c0_23, %c0_24] : memref<1x1x32xf32, #tpu.memory_space<vmem>>, vector<1x1x32xf32>
    %41 = vector.shape_cast %40 : vector<1x1x32xf32> to vector<1x32xf32>
    %42 = vector.broadcast %41 : vector<1x32xf32> to vector<8x32xf32>
    %43 = arith.addf %39, %42 : vector<8x32xf32>
    %c0_25 = arith.constant 0 : index
    %c0_26 = arith.constant 0 : index
    %c0_27 = arith.constant 0 : index
    %44 = vector.load %arg8[%c0_25, %c0_26, %c0_27] : memref<1x32x32xbf16, #tpu.memory_space<vmem>>, vector<1x32x32xbf16>
    %45 = vector.shape_cast %44 : vector<1x32x32xbf16> to vector<32x32xbf16>
    %cst_28 = arith.constant dense<0.000000e+00> : vector<8x32xf32>
    %46 = tpu.matmul %36, %45, %cst_28 {dimension_numbers = #tpu.dot_dimension_numbers<[1], [0], [0], [1], [0, 0, 1, 1], [], []>} : vector<8x32xbf16>, vector<32x32xbf16>, vector<8x32xf32> -> vector<8x32xf32>
    %c0_29 = arith.constant 0 : index
    %c0_30 = arith.constant 0 : index
    %c0_31 = arith.constant 0 : index
    %47 = vector.load %arg9[%c0_29, %c0_30, %c0_31] : memref<1x1x32xf32, #tpu.memory_space<vmem>>, vector<1x1x32xf32>
    %48 = vector.shape_cast %47 : vector<1x1x32xf32> to vector<1x32xf32>
    %49 = vector.broadcast %48 : vector<1x32xf32> to vector<8x32xf32>
    %50 = arith.addf %46, %49 : vector<8x32xf32>
    %c0_32 = arith.constant 0 : index
    %c0_33 = arith.constant 0 : index
    %c0_34 = arith.constant 0 : index
    %51 = vector.load %arg10[%c0_32, %c0_33, %c0_34] : memref<1x32x32xbf16, #tpu.memory_space<vmem>>, vector<1x32x32xbf16>
    %52 = vector.shape_cast %51 : vector<1x32x32xbf16> to vector<32x32xbf16>
    %cst_35 = arith.constant dense<0.000000e+00> : vector<8x32xf32>
    %53 = tpu.matmul %36, %52, %cst_35 {dimension_numbers = #tpu.dot_dimension_numbers<[1], [0], [0], [1], [0, 0, 1, 1], [], []>} : vector<8x32xbf16>, vector<32x32xbf16>, vector<8x32xf32> -> vector<8x32xf32>
    %c0_36 = arith.constant 0 : index
    %c0_37 = arith.constant 0 : index
    %c0_38 = arith.constant 0 : index
    %54 = vector.load %arg11[%c0_36, %c0_37, %c0_38] : memref<1x1x32xf32, #tpu.memory_space<vmem>>, vector<1x1x32xf32>
    %55 = vector.shape_cast %54 : vector<1x1x32xf32> to vector<1x32xf32>
    %56 = vector.broadcast %55 : vector<1x32xf32> to vector<8x32xf32>
    %57 = arith.addf %53, %56 : vector<8x32xf32>
    %cst_39 = arith.constant 0.353553385 : f32
    %58 = vector.broadcast %cst_39 : f32 to vector<8x32xf32>
    %59 = arith.mulf %43, %58 : vector<8x32xf32>
    %60 = vector.extract_strided_slice %59 {offsets = [0, 0], sizes = [8, 8], strides = [1, 1]} : vector<8x32xf32> to vector<8x8xf32>
    %61 = vector.extract_strided_slice %59 {offsets = [0, 8], sizes = [8, 8], strides = [1, 1]} : vector<8x32xf32> to vector<8x8xf32>
    %62 = vector.extract_strided_slice %59 {offsets = [0, 16], sizes = [8, 8], strides = [1, 1]} : vector<8x32xf32> to vector<8x8xf32>
    %63 = vector.extract_strided_slice %59 {offsets = [0, 24], sizes = [8, 8], strides = [1, 1]} : vector<8x32xf32> to vector<8x8xf32>
    %64 = vector.shape_cast %60 : vector<8x8xf32> to vector<1x8x8xf32>
    %65 = vector.shape_cast %61 : vector<8x8xf32> to vector<1x8x8xf32>
    %66 = vector.shape_cast %62 : vector<8x8xf32> to vector<1x8x8xf32>
    %67 = vector.shape_cast %63 : vector<8x8xf32> to vector<1x8x8xf32>
    %68 = tpu.concatenate %64, %65, %66, %67 in 0 : vector<1x8x8xf32>, vector<1x8x8xf32>, vector<1x8x8xf32>, vector<1x8x8xf32> -> vector<4x8x8xf32>
    %69 = arith.truncf %68 : vector<4x8x8xf32> to vector<4x8x8xbf16>
    %70 = vector.extract_strided_slice %50 {offsets = [0, 0], sizes = [8, 8], strides = [1, 1]} : vector<8x32xf32> to vector<8x8xf32>
    %71 = vector.extract_strided_slice %50 {offsets = [0, 8], sizes = [8, 8], strides = [1, 1]} : vector<8x32xf32> to vector<8x8xf32>
    %72 = vector.extract_strided_slice %50 {offsets = [0, 16], sizes = [8, 8], strides = [1, 1]} : vector<8x32xf32> to vector<8x8xf32>
    %73 = vector.extract_strided_slice %50 {offsets = [0, 24], sizes = [8, 8], strides = [1, 1]} : vector<8x32xf32> to vector<8x8xf32>
    %74 = vector.shape_cast %70 : vector<8x8xf32> to vector<1x8x8xf32>
    %75 = vector.shape_cast %71 : vector<8x8xf32> to vector<1x8x8xf32>
    %76 = vector.shape_cast %72 : vector<8x8xf32> to vector<1x8x8xf32>
    %77 = vector.shape_cast %73 : vector<8x8xf32> to vector<1x8x8xf32>
    %78 = tpu.concatenate %74, %75, %76, %77 in 0 : vector<1x8x8xf32>, vector<1x8x8xf32>, vector<1x8x8xf32>, vector<1x8x8xf32> -> vector<4x8x8xf32>
    %79 = arith.truncf %78 : vector<4x8x8xf32> to vector<4x8x8xbf16>
    %80 = vector.extract_strided_slice %57 {offsets = [0, 0], sizes = [8, 8], strides = [1, 1]} : vector<8x32xf32> to vector<8x8xf32>
    %81 = vector.extract_strided_slice %57 {offsets = [0, 8], sizes = [8, 8], strides = [1, 1]} : vector<8x32xf32> to vector<8x8xf32>
    %82 = vector.extract_strided_slice %57 {offsets = [0, 16], sizes = [8, 8], strides = [1, 1]} : vector<8x32xf32> to vector<8x8xf32>
    %83 = vector.extract_strided_slice %57 {offsets = [0, 24], sizes = [8, 8], strides = [1, 1]} : vector<8x32xf32> to vector<8x8xf32>
    %84 = vector.shape_cast %80 : vector<8x8xf32> to vector<1x8x8xf32>
    %85 = vector.shape_cast %81 : vector<8x8xf32> to vector<1x8x8xf32>
    %86 = vector.shape_cast %82 : vector<8x8xf32> to vector<1x8x8xf32>
    %87 = vector.shape_cast %83 : vector<8x8xf32> to vector<1x8x8xf32>
    %88 = tpu.concatenate %84, %85, %86, %87 in 0 : vector<1x8x8xf32>, vector<1x8x8xf32>, vector<1x8x8xf32>, vector<1x8x8xf32> -> vector<4x8x8xf32>
    %89 = arith.truncf %88 : vector<4x8x8xf32> to vector<4x8x8xbf16>
    "tpu.trace_start"() <{level = 10 : i32, message = "hqd,hkd->hqk"}> : () -> ()
    %cst_40 = arith.constant dense<0.000000e+00> : vector<4x8x8xf32>
    %90 = tpu.matmul %69, %79, %cst_40 {dimension_numbers = #tpu.dot_dimension_numbers<[2], [2], [1], [1], [0, 0, 0, 1, 1, 1], [0], [0]>} : vector<4x8x8xbf16>, vector<4x8x8xbf16>, vector<4x8x8xf32> -> vector<4x8x8xf32>
    "tpu.trace_stop"() : () -> ()
    %91 = vector.shape_cast %10 : vector<1x8xf32> to vector<1x1x8xf32>
    %92 = vector.broadcast %91 : vector<1x1x8xf32> to vector<4x8x8xf32>
    %93 = arith.addf %90, %92 : vector<4x8x8xf32>
    %cst_41 = arith.constant dense<0xFF800000> : vector<4x8xf32>
    %94 = vector.multi_reduction <maximumf>, %93, %cst_41 [2] : vector<4x8x8xf32> to vector<4x8xf32>
    %95 = vector.shape_cast %94 : vector<4x8xf32> to vector<4x8x1xf32>
    %96 = vector.broadcast %95 : vector<4x8x1xf32> to vector<4x8x8xf32>
    %97 = arith.subf %93, %96 : vector<4x8x8xf32>
    %98 = math.exp %97 : vector<4x8x8xf32>
    %cst_42 = arith.constant dense<0.000000e+00> : vector<4x8xf32>
    %99 = vector.multi_reduction <add>, %98, %cst_42 [2] : vector<4x8x8xf32> to vector<4x8xf32>
    %100 = vector.shape_cast %99 : vector<4x8xf32> to vector<4x8x1xf32>
    %101 = tpu.reciprocal %100 {approx = true} : vector<4x8x1xf32> -> vector<4x8x1xf32>
    %102 = vector.broadcast %101 : vector<4x8x1xf32> to vector<4x8x8xf32>
    %103 = arith.mulf %98, %102 : vector<4x8x8xf32>
    %104 = arith.truncf %103 : vector<4x8x8xf32> to vector<4x8x8xbf16>
    "tpu.trace_start"() <{level = 10 : i32, message = "hqk,hkd->hqd"}> : () -> ()
    %cst_43 = arith.constant dense<0.000000e+00> : vector<4x8x8xf32>
    %105 = tpu.matmul %104, %89, %cst_43 {dimension_numbers = #tpu.dot_dimension_numbers<[2], [1], [1], [2], [0, 0, 0, 1, 1, 2], [0], [0]>} : vector<4x8x8xbf16>, vector<4x8x8xbf16>, vector<4x8x8xf32> -> vector<4x8x8xf32>
    "tpu.trace_stop"() : () -> ()
    %106 = vector.extract_strided_slice %105 {offsets = [0, 0, 0], sizes = [1, 8, 8], strides = [1, 1, 1]} : vector<4x8x8xf32> to vector<1x8x8xf32>
    %107 = vector.shape_cast %106 : vector<1x8x8xf32> to vector<8x8xf32>
    %108 = vector.extract_strided_slice %105 {offsets = [1, 0, 0], sizes = [1, 8, 8], strides = [1, 1, 1]} : vector<4x8x8xf32> to vector<1x8x8xf32>
    %109 = vector.shape_cast %108 : vector<1x8x8xf32> to vector<8x8xf32>
    %110 = vector.extract_strided_slice %105 {offsets = [2, 0, 0], sizes = [1, 8, 8], strides = [1, 1, 1]} : vector<4x8x8xf32> to vector<1x8x8xf32>
    %111 = vector.shape_cast %110 : vector<1x8x8xf32> to vector<8x8xf32>
    %112 = vector.extract_strided_slice %105 {offsets = [3, 0, 0], sizes = [1, 8, 8], strides = [1, 1, 1]} : vector<4x8x8xf32> to vector<1x8x8xf32>
    %113 = vector.shape_cast %112 : vector<1x8x8xf32> to vector<8x8xf32>
    %114 = tpu.concatenate %107, %109, %111, %113 in 1 : vector<8x8xf32>, vector<8x8xf32>, vector<8x8xf32>, vector<8x8xf32> -> vector<8x32xf32>
    %115 = arith.truncf %114 : vector<8x32xf32> to vector<8x32xbf16>
    %c0_44 = arith.constant 0 : index
    %c0_45 = arith.constant 0 : index
    %c0_46 = arith.constant 0 : index
    %116 = vector.load %arg12[%c0_44, %c0_45, %c0_46] : memref<1x32x32xbf16, #tpu.memory_space<vmem>>, vector<1x32x32xbf16>
    %117 = vector.shape_cast %116 : vector<1x32x32xbf16> to vector<32x32xbf16>
    %cst_47 = arith.constant dense<0.000000e+00> : vector<8x32xf32>
    %118 = tpu.matmul %115, %117, %cst_47 {dimension_numbers = #tpu.dot_dimension_numbers<[1], [0], [0], [1], [0, 0, 1, 1], [], []>} : vector<8x32xbf16>, vector<32x32xbf16>, vector<8x32xf32> -> vector<8x32xf32>
    %c0_48 = arith.constant 0 : index
    %c0_49 = arith.constant 0 : index
    %c0_50 = arith.constant 0 : index
    %119 = vector.load %arg13[%c0_48, %c0_49, %c0_50] : memref<1x1x32xf32, #tpu.memory_space<vmem>>, vector<1x1x32xf32>
    %120 = vector.shape_cast %119 : vector<1x1x32xf32> to vector<1x32xf32>
    %121 = vector.broadcast %120 : vector<1x32xf32> to vector<8x32xf32>
    %122 = arith.addf %118, %121 : vector<8x32xf32>
    %123 = arith.addf %3, %122 : vector<8x32xf32>
    %c0_51 = arith.constant 0 : index
    %c0_52 = arith.constant 0 : index
    %c0_53 = arith.constant 0 : index
    %124 = vector.load %arg14[%c0_51, %c0_52, %c0_53] : memref<1x1x32xf32, #tpu.memory_space<vmem>>, vector<1x1x32xf32>
    %125 = vector.shape_cast %124 : vector<1x1x32xf32> to vector<1x32xf32>
    %c0_54 = arith.constant 0 : index
    %c0_55 = arith.constant 0 : index
    %c0_56 = arith.constant 0 : index
    %126 = vector.load %arg15[%c0_54, %c0_55, %c0_56] : memref<1x1x32xf32, #tpu.memory_space<vmem>>, vector<1x1x32xf32>
    %127 = vector.shape_cast %126 : vector<1x1x32xf32> to vector<1x32xf32>
    %cst_57 = arith.constant dense<0.000000e+00> : vector<8xf32>
    %128 = vector.multi_reduction <add>, %123, %cst_57 [1] : vector<8x32xf32> to vector<8xf32>
    %129 = vector.shape_cast %128 : vector<8xf32> to vector<8x1xf32>
    %cst_58 = arith.constant 3.200000e+01 : f32
    %130 = vector.broadcast %cst_58 : f32 to vector<8x1xf32>
    %131 = arith.divf %129, %130 : vector<8x1xf32>
    %132 = vector.broadcast %131 : vector<8x1xf32> to vector<8x32xf32>
    %133 = arith.subf %123, %132 : vector<8x32xf32>
    %134 = arith.mulf %133, %133 : vector<8x32xf32>
    %cst_59 = arith.constant dense<0.000000e+00> : vector<8xf32>
    %135 = vector.multi_reduction <add>, %134, %cst_59 [1] : vector<8x32xf32> to vector<8xf32>
    %136 = vector.shape_cast %135 : vector<8xf32> to vector<8x1xf32>
    %cst_60 = arith.constant 0.0322580636 : f32
    %137 = vector.broadcast %cst_60 : f32 to vector<8x1xf32>
    %138 = arith.mulf %136, %137 : vector<8x1xf32>
    %139 = math.sqrt %138 : vector<8x1xf32>
    %cst_61 = arith.constant 9.99999997E-7 : f32
    %140 = vector.broadcast %cst_61 : f32 to vector<8x1xf32>
    %141 = arith.addf %139, %140 : vector<8x1xf32>
    %142 = tpu.reciprocal %141 {approx = true} : vector<8x1xf32> -> vector<8x1xf32>
    %143 = vector.broadcast %125 : vector<1x32xf32> to vector<8x32xf32>
    %144 = arith.mulf %143, %133 : vector<8x32xf32>
    %145 = vector.broadcast %142 : vector<8x1xf32> to vector<8x32xf32>
    %146 = arith.mulf %144, %145 : vector<8x32xf32>
    %147 = vector.broadcast %127 : vector<1x32xf32> to vector<8x32xf32>
    %148 = arith.addf %146, %147 : vector<8x32xf32>
    %149 = arith.truncf %148 : vector<8x32xf32> to vector<8x32xbf16>
    %c0_62 = arith.constant 0 : index
    %c0_63 = arith.constant 0 : index
    %c0_64 = arith.constant 0 : index
    %150 = vector.load %arg16[%c0_62, %c0_63, %c0_64] : memref<1x32x64xbf16, #tpu.memory_space<vmem>>, vector<1x32x64xbf16>
    %151 = vector.shape_cast %150 : vector<1x32x64xbf16> to vector<32x64xbf16>
    %cst_65 = arith.constant dense<0.000000e+00> : vector<8x64xf32>
    %152 = tpu.matmul %149, %151, %cst_65 {dimension_numbers = #tpu.dot_dimension_numbers<[1], [0], [0], [1], [0, 0, 1, 1], [], []>} : vector<8x32xbf16>, vector<32x64xbf16>, vector<8x64xf32> -> vector<8x64xf32>
    %c0_66 = arith.constant 0 : index
    %c0_67 = arith.constant 0 : index
    %c0_68 = arith.constant 0 : index
    %153 = vector.load %arg17[%c0_66, %c0_67, %c0_68] : memref<1x1x64xf32, #tpu.memory_space<vmem>>, vector<1x1x64xf32>
    %154 = vector.shape_cast %153 : vector<1x1x64xf32> to vector<1x64xf32>
    %155 = vector.broadcast %154 : vector<1x64xf32> to vector<8x64xf32>
    %156 = arith.addf %152, %155 : vector<8x64xf32>
    %157 = arith.truncf %156 : vector<8x64xf32> to vector<8x64xbf16>
    %c0_69 = arith.constant 0 : index
    %c0_70 = arith.constant 0 : index
    %c0_71 = arith.constant 0 : index
    %158 = vector.load %arg18[%c0_69, %c0_70, %c0_71] : memref<1x64x32xbf16, #tpu.memory_space<vmem>>, vector<1x64x32xbf16>
    %159 = vector.shape_cast %158 : vector<1x64x32xbf16> to vector<64x32xbf16>
    %cst_72 = arith.constant dense<0.000000e+00> : vector<8x32xf32>
    %160 = tpu.matmul %157, %159, %cst_72 {dimension_numbers = #tpu.dot_dimension_numbers<[1], [0], [0], [1], [0, 0, 1, 1], [], []>} : vector<8x64xbf16>, vector<64x32xbf16>, vector<8x32xf32> -> vector<8x32xf32>
    %c0_73 = arith.constant 0 : index
    %c0_74 = arith.constant 0 : index
    %c0_75 = arith.constant 0 : index
    %161 = vector.load %arg19[%c0_73, %c0_74, %c0_75] : memref<1x1x32xf32, #tpu.memory_space<vmem>>, vector<1x1x32xf32>
    %162 = vector.shape_cast %161 : vector<1x1x32xf32> to vector<1x32xf32>
    %163 = vector.broadcast %162 : vector<1x32xf32> to vector<8x32xf32>
    %164 = arith.addf %160, %163 : vector<8x32xf32>
    %165 = arith.addf %123, %164 : vector<8x32xf32>
    %c0_76 = arith.constant 0 : index
    %c0_77 = arith.constant 0 : index
    %166 = vector.load %arg23[%c0_76, %c0_77] : memref<8x32xf32, #tpu.memory_space<vmem>>, vector<8x32xf32>
    tpu.vector_store %arg23[%c0_76, %c0_77], %165 {strides = array<i32>} : memref<8x32xf32, #tpu.memory_space<vmem>>, vector<8x32xf32>,
    %c1_i32 = arith.constant 1 : i32
    %167 = arith.cmpi eq, %arg1, %c1_i32 : i32
    %168 = arith.extui %167 : i1 to i32
    %c0_i32_78 = arith.constant 0 : i32
    %169 = arith.cmpi ne, %168, %c0_i32_78 : i32
    scf.if %169 {
      %c0_79 = arith.constant 0 : index
      %c0_80 = arith.constant 0 : index
      %170 = vector.load %arg20[%c0_79, %c0_80] : memref<1x32xf32, #tpu.memory_space<vmem>>, vector<1x32xf32>
      %c0_81 = arith.constant 0 : index
      %c0_82 = arith.constant 0 : index
      %171 = vector.load %arg21[%c0_81, %c0_82] : memref<1x32xf32, #tpu.memory_space<vmem>>, vector<1x32xf32>
      %cst_83 = arith.constant dense<0.000000e+00> : vector<8xf32>
      %172 = vector.multi_reduction <add>, %165, %cst_83 [1] : vector<8x32xf32> to vector<8xf32>
      %173 = vector.shape_cast %172 : vector<8xf32> to vector<8x1xf32>
      %cst_84 = arith.constant 3.200000e+01 : f32
      %174 = vector.broadcast %cst_84 : f32 to vector<8x1xf32>
      %175 = arith.divf %173, %174 : vector<8x1xf32>
      %176 = vector.broadcast %175 : vector<8x1xf32> to vector<8x32xf32>
      %177 = arith.subf %165, %176 : vector<8x32xf32>
      %178 = arith.mulf %177, %177 : vector<8x32xf32>
      %cst_85 = arith.constant dense<0.000000e+00> : vector<8xf32>
      %179 = vector.multi_reduction <add>, %178, %cst_85 [1] : vector<8x32xf32> to vector<8xf32>
      %180 = vector.shape_cast %179 : vector<8xf32> to vector<8x1xf32>
      %cst_86 = arith.constant 0.0322580636 : f32
      %181 = vector.broadcast %cst_86 : f32 to vector<8x1xf32>
      %182 = arith.mulf %180, %181 : vector<8x1xf32>
      %183 = math.sqrt %182 : vector<8x1xf32>
      %cst_87 = arith.constant 9.99999997E-7 : f32
      %184 = vector.broadcast %cst_87 : f32 to vector<8x1xf32>
      %185 = arith.addf %183, %184 : vector<8x1xf32>
      %186 = tpu.reciprocal %185 {approx = true} : vector<8x1xf32> -> vector<8x1xf32>
      %187 = vector.broadcast %170 : vector<1x32xf32> to vector<8x32xf32>
      %188 = arith.mulf %187, %177 : vector<8x32xf32>
      %189 = vector.broadcast %186 : vector<8x1xf32> to vector<8x32xf32>
      %190 = arith.mulf %188, %189 : vector<8x32xf32>
      %191 = vector.broadcast %171 : vector<1x32xf32> to vector<8x32xf32>
      %192 = arith.addf %190, %191 : vector<8x32xf32>
      %c0_88 = arith.constant 0 : index
      %c0_89 = arith.constant 0 : index
      %c0_90 = arith.constant 0 : index
      %193 = vector.load %arg22[%c0_88, %c0_89, %c0_90] : memref<1x8x32xf32, #tpu.memory_space<vmem>>, vector<1x8x32xf32>
      %194 = vector.shape_cast %193 : vector<1x8x32xf32> to vector<8x32xf32>
      %195 = vector.shape_cast %192 : vector<8x32xf32> to vector<1x8x32xf32>
      tpu.vector_store %arg22[%c0_88, %c0_89, %c0_90], %195 {strides = array<i32>} : memref<1x8x32xf32, #tpu.memory_space<vmem>>, vector<1x8x32xf32>,
    } else {
    }
    return
  }
  func.func @transform_0(%arg0: i32, %arg1: i32) -> (i32, i32, i32) {
    %c0_i32 = arith.constant 0 : i32
    %c0_i32_0 = arith.constant 0 : i32
    %c0_i32_1 = arith.constant 0 : i32
    return %arg0, %c0_i32, %c0_i32_0 : i32, i32, i32
  }
  func.func @transform_1(%arg0: i32, %arg1: i32) -> (i32, i32, i32) {
    %c0_i32 = arith.constant 0 : i32
    %c0_i32_0 = arith.constant 0 : i32
    %c0_i32_1 = arith.constant 0 : i32
    return %arg0, %c0_i32, %c0_i32_0 : i32, i32, i32
  }
  func.func @transform_2(%arg0: i32, %arg1: i32) -> (i32, i32, i32) {
    %c0_i32 = arith.constant 0 : i32
    %c0_i32_0 = arith.constant 0 : i32
    %c0_i32_1 = arith.constant 0 : i32
    return %arg1, %c0_i32, %c0_i32_0 : i32, i32, i32
  }
  func.func @transform_3(%arg0: i32, %arg1: i32) -> (i32, i32, i32) {
    %c0_i32 = arith.constant 0 : i32
    %c0_i32_0 = arith.constant 0 : i32
    %c0_i32_1 = arith.constant 0 : i32
    return %arg1, %c0_i32, %c0_i32_0 : i32, i32, i32
  }
  func.func @transform_4(%arg0: i32, %arg1: i32) -> (i32, i32, i32) {
    %c0_i32 = arith.constant 0 : i32
    %c0_i32_0 = arith.constant 0 : i32
    %c0_i32_1 = arith.constant 0 : i32
    return %arg1, %c0_i32, %c0_i32_0 : i32, i32, i32
  }
  func.func @transform_5(%arg0: i32, %arg1: i32) -> (i32, i32, i32) {
    %c0_i32 = arith.constant 0 : i32
    %c0_i32_0 = arith.constant 0 : i32
    %c0_i32_1 = arith.constant 0 : i32
    return %arg1, %c0_i32, %c0_i32_0 : i32, i32, i32
  }
  func.func @transform_6(%arg0: i32, %arg1: i32) -> (i32, i32, i32) {
    %c0_i32 = arith.constant 0 : i32
    %c0_i32_0 = arith.constant 0 : i32
    %c0_i32_1 = arith.constant 0 : i32
    return %arg1, %c0_i32, %c0_i32_0 : i32, i32, i32
  }
  func.func @transform_7(%arg0: i32, %arg1: i32) -> (i32, i32, i32) {
    %c0_i32 = arith.constant 0 : i32
    %c0_i32_0 = arith.constant 0 : i32
    %c0_i32_1 = arith.constant 0 : i32
    return %arg1, %c0_i32, %c0_i32_0 : i32, i32, i32
  }
  func.func @transform_8(%arg0: i32, %arg1: i32) -> (i32, i32, i32) {
    %c0_i32 = arith.constant 0 : i32
    %c0_i32_0 = arith.constant 0 : i32
    %c0_i32_1 = arith.constant 0 : i32
    return %arg1, %c0_i32, %c0_i32_0 : i32, i32, i32
  }
  func.func @transform_9(%arg0: i32, %arg1: i32) -> (i32, i32, i32) {
    %c0_i32 = arith.constant 0 : i32
    %c0_i32_0 = arith.constant 0 : i32
    %c0_i32_1 = arith.constant 0 : i32
    return %arg1, %c0_i32, %c0_i32_0 : i32, i32, i32
  }
  func.func @transform_10(%arg0: i32, %arg1: i32) -> (i32, i32, i32) {
    %c0_i32 = arith.constant 0 : i32
    %c0_i32_0 = arith.constant 0 : i32
    %c0_i32_1 = arith.constant 0 : i32
    return %arg1, %c0_i32, %c0_i32_0 : i32, i32, i32
  }
  func.func @transform_11(%arg0: i32, %arg1: i32) -> (i32, i32, i32) {
    %c0_i32 = arith.constant 0 : i32
    %c0_i32_0 = arith.constant 0 : i32
    %c0_i32_1 = arith.constant 0 : i32
    return %arg1, %c0_i32, %c0_i32_0 : i32, i32, i32
  }
  func.func @transform_12(%arg0: i32, %arg1: i32) -> (i32, i32, i32) {
    %c0_i32 = arith.constant 0 : i32
    %c0_i32_0 = arith.constant 0 : i32
    %c0_i32_1 = arith.constant 0 : i32
    return %arg1, %c0_i32, %c0_i32_0 : i32, i32, i32
  }
  func.func @transform_13(%arg0: i32, %arg1: i32) -> (i32, i32, i32) {
    %c0_i32 = arith.constant 0 : i32
    %c0_i32_0 = arith.constant 0 : i32
    %c0_i32_1 = arith.constant 0 : i32
    return %arg1, %c0_i32, %c0_i32_0 : i32, i32, i32
  }
  func.func @transform_14(%arg0: i32, %arg1: i32) -> (i32, i32, i32) {
    %c0_i32 = arith.constant 0 : i32
    %c0_i32_0 = arith.constant 0 : i32
    %c0_i32_1 = arith.constant 0 : i32
    return %arg1, %c0_i32, %c0_i32_0 : i32, i32, i32
  }
  func.func @transform_15(%arg0: i32, %arg1: i32) -> (i32, i32, i32) {
    %c0_i32 = arith.constant 0 : i32
    %c0_i32_0 = arith.constant 0 : i32
    %c0_i32_1 = arith.constant 0 : i32
    return %arg1, %c0_i32, %c0_i32_0 : i32, i32, i32
  }
  func.func @transform_16(%arg0: i32, %arg1: i32) -> (i32, i32, i32) {
    %c0_i32 = arith.constant 0 : i32
    %c0_i32_0 = arith.constant 0 : i32
    %c0_i32_1 = arith.constant 0 : i32
    return %arg1, %c0_i32, %c0_i32_0 : i32, i32, i32
  }
  func.func @transform_17(%arg0: i32, %arg1: i32) -> (i32, i32, i32) {
    %c0_i32 = arith.constant 0 : i32
    %c0_i32_0 = arith.constant 0 : i32
    %c0_i32_1 = arith.constant 0 : i32
    return %arg1, %c0_i32, %c0_i32_0 : i32, i32, i32
  }
  func.func @transform_18(%arg0: i32, %arg1: i32) -> (i32, i32) {
    %c0_i32 = arith.constant 0 : i32
    %c0_i32_0 = arith.constant 0 : i32
    %c0_i32_1 = arith.constant 0 : i32
    return %c0_i32, %c0_i32_0 : i32, i32
  }
  func.func @transform_19(%arg0: i32, %arg1: i32) -> (i32, i32) {
    %c0_i32 = arith.constant 0 : i32
    %c0_i32_0 = arith.constant 0 : i32
    %c0_i32_1 = arith.constant 0 : i32
    return %c0_i32, %c0_i32_0 : i32, i32
  }
  func.func @transform_20(%arg0: i32, %arg1: i32) -> (i32, i32, i32) {
    %c0_i32 = arith.constant 0 : i32
    %c0_i32_0 = arith.constant 0 : i32
    %c0_i32_1 = arith.constant 0 : i32
    return %arg0, %c0_i32, %c0_i32_0 : i32, i32, i32
  }
}

</mosaic_0001>

<llo_original>
// kernel: tpu_custom_call.1
$region0: #{tpu_custom_call.1}
  #allocation0 [shape = 'u32[]', space=smem, size = 0x4, offset = 0x4, fixed_abs, tag = 'smem constant byte address 0x4 - core index']
  #allocation1 [shape = 'u32[144,128]{1,0:T(1,128)}', space=vmem, size = 0x12000, scoped, tag = 'internal scratch']
  #allocation2 [shape = 'f32[8,32]{1,0:T(8,128)}', space=vmem, size = 0x1000, scoped, tag = 'scratch operand']
  %s0 = inlined_call_operand.hbm [shape: f32[2,8,32], index: 0, kind: input, shape index: {}]
  %s1 = inlined_call_operand.hbm [shape: f32[2,1,8], index: 1, kind: input, shape index: {}]
  %s2 = inlined_call_operand.hbm [shape: f32[2,1,32], index: 2, kind: input, shape index: {}]
  %s3 = inlined_call_operand.hbm [shape: f32[2,1,32], index: 3, kind: input, shape index: {}]
  %s4 = inlined_call_operand.hbm [shape: bf16[2,32,32], index: 4, kind: input, shape index: {}]
  %s5 = inlined_call_operand.hbm [shape: f32[2,1,32], index: 5, kind: input, shape index: {}]
  %s6 = inlined_call_operand.hbm [shape: bf16[2,32,32], index: 6, kind: input, shape index: {}]
  %s7 = inlined_call_operand.hbm [shape: f32[2,1,32], index: 7, kind: input, shape index: {}]
  %s8 = inlined_call_operand.hbm [shape: bf16[2,32,32], index: 8, kind: input, shape index: {}]
  %s9 = inlined_call_operand.hbm [shape: f32[2,1,32], index: 9, kind: input, shape index: {}]
  %s10 = inlined_call_operand.hbm [shape: bf16[2,32,32], index: 10, kind: input, shape index: {}]
  %s11 = inlined_call_operand.hbm [shape: f32[2,1,32], index: 11, kind: input, shape index: {}]
  %s12 = inlined_call_operand.hbm [shape: f32[2,1,32], index: 12, kind: input, shape index: {}]
  %s13 = inlined_call_operand.hbm [shape: f32[2,1,32], index: 13, kind: input, shape index: {}]
  %s14 = inlined_call_operand.hbm [shape: bf16[2,32,64], index: 14, kind: input, shape index: {}]
  %s15 = inlined_call_operand.hbm [shape: f32[2,1,64], index: 15, kind: input, shape index: {}]
  %s16 = inlined_call_operand.hbm [shape: bf16[2,64,32], index: 16, kind: input, shape index: {}]
  %s17 = inlined_call_operand.hbm [shape: f32[2,1,32], index: 17, kind: input, shape index: {}]
  %s18 = inlined_call_operand.hbm [shape: f32[1,32], index: 18, kind: input, shape index: {}]
  %s19 = inlined_call_operand.hbm [shape: f32[1,32], index: 19, kind: input, shape index: {}]
  %s20 = inlined_call_operand.hbm [shape: f32[2,8,32], index: 20, kind: output, shape index: {}]
  %s21 = sld [smem:[#allocation0]]
  $region201: #{tpu_custom_call.1} parent=0
    _
  %s23 = ssub.s32 1, %s21
  %s24 = scalar_select 0, %s23, %s21
  $region1: #{tpu_custom_call.1} parent=0
    #allocation3 [shape = 'u8[8192]{0}', space=vmem, size = 0x2000, scoped, tag = 'input window, operand 0']
    #allocation4 [shape = 's32[2]{0}', space=sflag, size = 0x8, scoped, tag = 'scoped memory for tpu_custom_call.1']
    #allocation5 [shape = 's32[2]{0}', space=sflag, size = 0x8, scoped, tag = 'scoped memory for tpu_custom_call.1']
    #allocation6 [shape = 'u8[1024]{0}', space=vmem, size = 0x400, scoped, tag = 'input window, operand 1']
    #allocation7 [shape = 's32[2]{0}', space=sflag, size = 0x8, scoped, tag = 'scoped memory for tpu_custom_call.1']
    #allocation8 [shape = 'u8[1024]{0}', space=vmem, size = 0x400, scoped, tag = 'input window, operand 2']
    #allocation9 [shape = 'u8[1024]{0}', space=vmem, size = 0x400, scoped, tag = 'input window, operand 3']
    #allocation10 [shape = 's32[2]{0}', space=sflag, size = 0x8, scoped, tag = 'scoped memory for tpu_custom_call.1']
    #allocation11 [shape = 'u8[16384]{0}', space=vmem, size = 0x4000, scoped, tag = 'input window, operand 4']
    #allocation12 [shape = 'u8[1024]{0}', space=vmem, size = 0x400, scoped, tag = 'input window, operand 5']
    #allocation13 [shape = 's32[2]{0}', space=sflag, size = 0x8, scoped, tag = 'scoped memory for tpu_custom_call.1']
    #allocation14 [shape = 'u8[16384]{0}', space=vmem, size = 0x4000, scoped, tag = 'input window, operand 6']
    #allocation15 [shape = 'u8[1024]{0}', space=vmem, size = 0x400, scoped, tag = 'input window, operand 7']
    #allocation16 [shape = 's32[2]{0}', space=sflag, size = 0x8, scoped, tag = 'scoped memory for tpu_custom_call.1']
    #allocation17 [shape = 'u8[16384]{0}', space=vmem, size = 0x4000, scoped, tag = 'input window, operand 8']
    #allocation18 [shape = 'u8[1024]{0}', space=vmem, size = 0x400, scoped, tag = 'input window, operand 9']
    #allocation19 [shape = 's32[2]{0}', space=sflag, size = 0x8, scoped, tag = 'scoped memory for tpu_custom_call.1']
    #allocation20 [shape = 'u8[16384]{0}', space=vmem, size = 0x4000, scoped, tag = 'input window, operand 10']
    #allocation21 [shape = 'u8[1024]{0}', space=vmem, size = 0x400, scoped, tag = 'input window, operand 11']
    #allocation22 [shape = 's32[2]{0}', space=sflag, size = 0x8, scoped, tag = 'scoped memory for tpu_custom_call.1']
    #allocation23 [shape = 'u8[1024]{0}', space=vmem, size = 0x400, scoped, tag = 'input window, operand 12']
    #allocation24 [shape = 'u8[1024]{0}', space=vmem, size = 0x400, scoped, tag = 'input window, operand 13']
    #allocation25 [shape = 's32[2]{0}', space=sflag, size = 0x8, scoped, tag = 'scoped memory for tpu_custom_call.1']
    #allocation26 [shape = 'u8[16384]{0}', space=vmem, size = 0x4000, scoped, tag = 'input window, operand 14']
    #allocation27 [shape = 'u8[1024]{0}', space=vmem, size = 0x400, scoped, tag = 'input window, operand 15']
    #allocation28 [shape = 's32[2]{0}', space=sflag, size = 0x8, scoped, tag = 'scoped memory for tpu_custom_call.1']
    #allocation29 [shape = 'u8[32768]{0}', space=vmem, size = 0x8000, scoped, tag = 'input window, operand 16']
    #allocation30 [shape = 'u8[1024]{0}', space=vmem, size = 0x400, scoped, tag = 'input window, operand 17']
    #allocation31 [shape = 's32[2]{0}', space=sflag, size = 0x8, scoped, tag = 'scoped memory for tpu_custom_call.1']
    #allocation32 [shape = 'u8[512]{0}', space=vmem, size = 0x400, scoped, tag = 'input window, operand 18, single buffered']
    #allocation33 [shape = 'u8[512]{0}', space=vmem, size = 0x400, scoped, tag = 'input window, operand 19, single buffered']
    #allocation34 [shape = 's32[1]{0}', space=sflag, size = 0x4, scoped, tag = 'scoped memory for tpu_custom_call.1']
    #allocation35 [shape = 'u8[8192]{0}', space=vmem, size = 0x2000, scoped, tag = 'output window, operand 0']
    %25 = vsyncpa [#allocation4], 0
    %s26 = scalar_lea.sflag [#allocation4], 1
    %27 = vsyncpa %s26, 0
    %28 = vsyncpa [#allocation7], 0
    %s29 = scalar_lea.sflag [#allocation7], 1
    %30 = vsyncpa %s29, 0
    %31 = vsyncpa [#allocation10], 0
    %s32 = scalar_lea.sflag [#allocation10], 1
    %33 = vsyncpa %s32, 0
    %34 = vsyncpa [#allocation13], 0
    %s35 = scalar_lea.sflag [#allocation13], 1
    %36 = vsyncpa %s35, 0
    %37 = vsyncpa [#allocation16], 0
    %s38 = scalar_lea.sflag [#allocation16], 1
    %39 = vsyncpa %s38, 0
    %40 = vsyncpa [#allocation19], 0
    %s41 = scalar_lea.sflag [#allocation19], 1
    %42 = vsyncpa %s41, 0
    %43 = vsyncpa [#allocation22], 0
    %s44 = scalar_lea.sflag [#allocation22], 1
    %45 = vsyncpa %s44, 0
    %46 = vsyncpa [#allocation25], 0
    %s47 = scalar_lea.sflag [#allocation25], 1
    %48 = vsyncpa %s47, 0
    %49 = vsyncpa [#allocation28], 0
    %s50 = scalar_lea.sflag [#allocation28], 1
    %51 = vsyncpa %s50, 0
    %52 = vsyncpa [#allocation31], 0
    %s53 = scalar_lea.sflag [#allocation31], 1
    %54 = vsyncpa %s53, 0
    %55 = vsyncpa [#allocation34], 0
    %56 = vsyncpa [#allocation5], 0
    %s57 = scalar_lea.sflag [#allocation5], 1
    %58 = vsyncpa %s57, 0
    loop: start=0, step=1, limit=6
    $region2: #{tpu_custom_call.1} parent=1 // loop_pre_header
      _
    $region3: #{tpu_custom_call.1} parent=1 // loop_header
      %s60 = sphi 0, %s64
      %p61 = scmp.ge.s32.totalorder %s60, 6
      %s67 = sphi 0, %s79
      %s68 = sphi 0, %s75
      %s69 = sphi 0, %s67
      %s70 = sphi 0, %s68
      %s71 = sphi 0, %s69
      %s72 = sphi 0, %s70
      %s82 = sphi 0, %s84
      %s85 = sphi 0, %s82
      %s86 = sphi 0, %s85
      %s102 = sphi 0, %s86
      %s108 = sphi 0, %s110
      %s111 = sphi 0, %s108
      %s112 = sphi 0, %s111
      %s128 = sphi 0, %s112
      %s134 = sphi 0, %s136
      %s137 = sphi 0, %s134
      %s138 = sphi 0, %s137
      %s154 = sphi 0, %s138
      %s160 = sphi 0, %s162
      %s163 = sphi 0, %s160
      %s164 = sphi 0, %s163
      %s180 = sphi 0, %s164
      %s186 = sphi 0, %s188
      %s189 = sphi 0, %s186
      %s190 = sphi 0, %s189
      %s206 = sphi 0, %s190
      %s212 = sphi 0, %s214
      %s215 = sphi 0, %s212
      %s216 = sphi 0, %s215
      %s232 = sphi 0, %s216
      %s238 = sphi 0, %s240
      %s241 = sphi 0, %s238
      %s242 = sphi 0, %s241
      %s258 = sphi 0, %s242
      %s264 = sphi 0, %s266
      %s267 = sphi 0, %s264
      %s268 = sphi 0, %s267
      %s284 = sphi 0, %s268
      %s290 = sphi 0, %s292
      %s293 = sphi 0, %s290
      %s294 = sphi 0, %s293
      %s310 = sphi 0, %s294
      %s316 = sphi 0, %s318
      %s319 = sphi 0, %s316
      %s320 = sphi 0, %s319
      %s336 = sphi 0, %s320
      %s342 = sphi 0, %s344
      %s345 = sphi 0, %s342
      %s346 = sphi 0, %s345
      %s362 = sphi 0, %s346
      %s368 = sphi 0, %s370
      %s371 = sphi 0, %s368
      %s372 = sphi 0, %s371
      %s388 = sphi 0, %s372
      %s394 = sphi 0, %s396
      %s397 = sphi 0, %s394
      %s398 = sphi 0, %s397
      %s414 = sphi 0, %s398
      %s420 = sphi 0, %s422
      %s423 = sphi 0, %s420
      %s424 = sphi 0, %s423
      %s440 = sphi 0, %s424
      %s446 = sphi 0, %s448
      %s449 = sphi 0, %s446
      %s450 = sphi 0, %s449
      %s466 = sphi 0, %s450
      %s472 = sphi 0, %s474
      %s475 = sphi 0, %s472
      %s476 = sphi 0, %s475
      %s492 = sphi 0, %s476
      %s498 = sphi 0, %s500
      %s501 = sphi 0, %s498
      %s502 = sphi 0, %s501
      %s518 = sphi 0, %s502
      %s524 = sphi 0, %s526
      %s527 = sphi 0, %s524
      %s528 = sphi 0, %s527
      %s544 = sphi 0, %s528
      %s548 = sphi 0, %s548
      %s550 = sphi 0, %s548
      %s551 = sphi 0, %s550
      %s565 = sphi 0, %s551
      %s569 = sphi 0, %s569
      %s571 = sphi 0, %s569
      %s572 = sphi 0, %s571
      %s586 = sphi 0, %s572
      %s592 = sphi 0, %s594
      %s595 = sphi 0, %s592
      %s596 = sphi 0, %s595
      %s612 = sphi 0, %s596
    $region4: #{tpu_custom_call.1} parent=1 // loop_header_branch
      %63 = sbr.rel (%p61) target = $region8
    $region5: #{tpu_custom_call.1} parent=1 // loop_body
      %s65 = ssub.s32 %s60, 1
      %s66 = ssub.s32 %s60, 2
      %s73 = sadd.s32 1, %s68
      %p74 = scmp.ge.s32.totalorder %s73, 2
      %s75 = scalar_select %p74, 0, %s73
      %s76 = sadd.s32 1, %s67
      %s77 = scalar_select %p74, %s76, %s67
      %p78 = scmp.ge.s32.totalorder %s77, 2
      %s79 = scalar_select %p78, 0, %s77
      %s80 = ssub.s32 %s67, %s79
      %p81 = scmp.eq.s32.totalorder %s80, 0
      %s83 = sadd.s32 %s82, 1
      %s84 = scalar_select %p81, %s82, %s83
      %p87 = pneg %p81
      %p88 = scmp.eq.s32.totalorder %s60, 3
      %p89 = por %p87, %p88
      %p90 = scmp.ne.s32.totalorder %s82, %s85
      %p91 = scmp.eq.s32.totalorder %s60, 0
      %p92 = por %p90, %p91
      %p93 = scmp.ne.s32.totalorder %s82, %s85
      %p94 = scmp.eq.s32.totalorder %s65, 3
      %p95 = por %p93, %p94
      %p96 = scmp.ne.s32.totalorder %s85, %s86
      %p97 = scmp.eq.s32.totalorder %s65, 0
      %p98 = por %p96, %p97
      %p99 = scmp.ne.s32.totalorder %s85, %s86
      %p100 = scmp.eq.s32.totalorder %s66, 3
      %p101 = por %p99, %p100
      %p103 = scmp.ne.s32.totalorder %s86, %s102
      %p104 = scmp.eq.s32.totalorder %s66, 0
      %p105 = por %p103, %p104
      %s106 = ssub.s32 %s67, %s79
      %p107 = scmp.eq.s32.totalorder %s106, 0
      %s109 = sadd.s32 %s108, 1
      %s110 = scalar_select %p107, %s108, %s109
      %p113 = pneg %p107
      %p114 = scmp.eq.s32.totalorder %s60, 3
      %p115 = por %p113, %p114
      %p116 = scmp.ne.s32.totalorder %s108, %s111
      %p117 = scmp.eq.s32.totalorder %s60, 0
      %p118 = por %p116, %p117
      %p119 = scmp.ne.s32.totalorder %s108, %s111
      %p120 = scmp.eq.s32.totalorder %s65, 3
      %p121 = por %p119, %p120
      %p122 = scmp.ne.s32.totalorder %s111, %s112
      %p123 = scmp.eq.s32.totalorder %s65, 0
      %p124 = por %p122, %p123
      %p125 = scmp.ne.s32.totalorder %s111, %s112
      %p126 = scmp.eq.s32.totalorder %s66, 3
      %p127 = por %p125, %p126
      %p129 = scmp.ne.s32.totalorder %s112, %s128
      %p130 = scmp.eq.s32.totalorder %s66, 0
      %p131 = por %p129, %p130
      %s132 = ssub.s32 %s68, %s75
      %p133 = scmp.eq.s32.totalorder %s132, 0
      %s135 = sadd.s32 %s134, 1
      %s136 = scalar_select %p133, %s134, %s135
      %p139 = pneg %p133
      %p140 = scmp.eq.s32.totalorder %s60, 3
      %p141 = por %p139, %p140
      %p142 = scmp.ne.s32.totalorder %s134, %s137
      %p143 = scmp.eq.s32.totalorder %s60, 0
      %p144 = por %p142, %p143
      %p145 = scmp.ne.s32.totalorder %s134, %s137
      %p146 = scmp.eq.s32.totalorder %s65, 3
      %p147 = por %p145, %p146
      %p148 = scmp.ne.s32.totalorder %s137, %s138
      %p149 = scmp.eq.s32.totalorder %s65, 0
      %p150 = por %p148, %p149
      %p151 = scmp.ne.s32.totalorder %s137, %s138
      %p152 = scmp.eq.s32.totalorder %s66, 3
      %p153 = por %p151, %p152
      %p155 = scmp.ne.s32.totalorder %s138, %s154
      %p156 = scmp.eq.s32.totalorder %s66, 0
      %p157 = por %p155, %p156
      %s158 = ssub.s32 %s68, %s75
      %p159 = scmp.eq.s32.totalorder %s158, 0
      %s161 = sadd.s32 %s160, 1
      %s162 = scalar_select %p159, %s160, %s161
      %p165 = pneg %p159
      %p166 = scmp.eq.s32.totalorder %s60, 3
      %p167 = por %p165, %p166
      %p168 = scmp.ne.s32.totalorder %s160, %s163
      %p169 = scmp.eq.s32.totalorder %s60, 0
      %p170 = por %p168, %p169
      %p171 = scmp.ne.s32.totalorder %s160, %s163
      %p172 = scmp.eq.s32.totalorder %s65, 3
      %p173 = por %p171, %p172
      %p174 = scmp.ne.s32.totalorder %s163, %s164
      %p175 = scmp.eq.s32.totalorder %s65, 0
      %p176 = por %p174, %p175
      %p177 = scmp.ne.s32.totalorder %s163, %s164
      %p178 = scmp.eq.s32.totalorder %s66, 3
      %p179 = por %p177, %p178
      %p181 = scmp.ne.s32.totalorder %s164, %s180
      %p182 = scmp.eq.s32.totalorder %s66, 0
      %p183 = por %p181, %p182
      %s184 = ssub.s32 %s68, %s75
      %p185 = scmp.eq.s32.totalorder %s184, 0
      %s187 = sadd.s32 %s186, 1
      %s188 = scalar_select %p185, %s186, %s187
      %p191 = pneg %p185
      %p192 = scmp.eq.s32.totalorder %s60, 3
      %p193 = por %p191, %p192
      %p194 = scmp.ne.s32.totalorder %s186, %s189
      %p195 = scmp.eq.s32.totalorder %s60, 0
      %p196 = por %p194, %p195
      %p197 = scmp.ne.s32.totalorder %s186, %s189
      %p198 = scmp.eq.s32.totalorder %s65, 3
      %p199 = por %p197, %p198
      %p200 = scmp.ne.s32.totalorder %s189, %s190
      %p201 = scmp.eq.s32.totalorder %s65, 0
      %p202 = por %p200, %p201
      %p203 = scmp.ne.s32.totalorder %s189, %s190
      %p204 = scmp.eq.s32.totalorder %s66, 3
      %p205 = por %p203, %p204
      %p207 = scmp.ne.s32.totalorder %s190, %s206
      %p208 = scmp.eq.s32.totalorder %s66, 0
      %p209 = por %p207, %p208
      %s210 = ssub.s32 %s68, %s75
      %p211 = scmp.eq.s32.totalorder %s210, 0
      %s213 = sadd.s32 %s212, 1
      %s214 = scalar_select %p211, %s212, %s213
      %p217 = pneg %p211
      %p218 = scmp.eq.s32.totalorder %s60, 3
      %p219 = por %p217, %p218
      %p220 = scmp.ne.s32.totalorder %s212, %s215
      %p221 = scmp.eq.s32.totalorder %s60, 0
      %p222 = por %p220, %p221
      %p223 = scmp.ne.s32.totalorder %s212, %s215
      %p224 = scmp.eq.s32.totalorder %s65, 3
      %p225 = por %p223, %p224
      %p226 = scmp.ne.s32.totalorder %s215, %s216
      %p227 = scmp.eq.s32.totalorder %s65, 0
      %p228 = por %p226, %p227
      %p229 = scmp.ne.s32.totalorder %s215, %s216
      %p230 = scmp.eq.s32.totalorder %s66, 3
      %p231 = por %p229, %p230
      %p233 = scmp.ne.s32.totalorder %s216, %s232
      %p234 = scmp.eq.s32.totalorder %s66, 0
      %p235 = por %p233, %p234
      %s236 = ssub.s32 %s68, %s75
      %p237 = scmp.eq.s32.totalorder %s236, 0
      %s239 = sadd.s32 %s238, 1
      %s240 = scalar_select %p237, %s238, %s239
      %p243 = pneg %p237
      %p244 = scmp.eq.s32.totalorder %s60, 3
      %p245 = por %p243, %p244
      %p246 = scmp.ne.s32.totalorder %s238, %s241
      %p247 = scmp.eq.s32.totalorder %s60, 0
      %p248 = por %p246, %p247
      %p249 = scmp.ne.s32.totalorder %s238, %s241
      %p250 = scmp.eq.s32.totalorder %s65, 3
      %p251 = por %p249, %p250
      %p252 = scmp.ne.s32.totalorder %s241, %s242
      %p253 = scmp.eq.s32.totalorder %s65, 0
      %p254 = por %p252, %p253
      %p255 = scmp.ne.s32.totalorder %s241, %s242
      %p256 = scmp.eq.s32.totalorder %s66, 3
      %p257 = por %p255, %p256
      %p259 = scmp.ne.s32.totalorder %s242, %s258
      %p260 = scmp.eq.s32.totalorder %s66, 0
      %p261 = por %p259, %p260
      %s262 = ssub.s32 %s68, %s75
      %p263 = scmp.eq.s32.totalorder %s262, 0
      %s265 = sadd.s32 %s264, 1
      %s266 = scalar_select %p263, %s264, %s265
      %p269 = pneg %p263
      %p270 = scmp.eq.s32.totalorder %s60, 3
      %p271 = por %p269, %p270
      %p272 = scmp.ne.s32.totalorder %s264, %s267
      %p273 = scmp.eq.s32.totalorder %s60, 0
      %p274 = por %p272, %p273
      %p275 = scmp.ne.s32.totalorder %s264, %s267
      %p276 = scmp.eq.s32.totalorder %s65, 3
      %p277 = por %p275, %p276
      %p278 = scmp.ne.s32.totalorder %s267, %s268
      %p279 = scmp.eq.s32.totalorder %s65, 0
      %p280 = por %p278, %p279
      %p281 = scmp.ne.s32.totalorder %s267, %s268
      %p282 = scmp.eq.s32.totalorder %s66, 3
      %p283 = por %p281, %p282
      %p285 = scmp.ne.s32.totalorder %s268, %s284
      %p286 = scmp.eq.s32.totalorder %s66, 0
      %p287 = por %p285, %p286
      %s288 = ssub.s32 %s68, %s75
      %p289 = scmp.eq.s32.totalorder %s288, 0
      %s291 = sadd.s32 %s290, 1
      %s292 = scalar_select %p289, %s290, %s291
      %p295 = pneg %p289
      %p296 = scmp.eq.s32.totalorder %s60, 3
      %p297 = por %p295, %p296
      %p298 = scmp.ne.s32.totalorder %s290, %s293
      %p299 = scmp.eq.s32.totalorder %s60, 0
      %p300 = por %p298, %p299
      %p301 = scmp.ne.s32.totalorder %s290, %s293
      %p302 = scmp.eq.s32.totalorder %s65, 3
      %p303 = por %p301, %p302
      %p304 = scmp.ne.s32.totalorder %s293, %s294
      %p305 = scmp.eq.s32.totalorder %s65, 0
      %p306 = por %p304, %p305
      %p307 = scmp.ne.s32.totalorder %s293, %s294
      %p308 = scmp.eq.s32.totalorder %s66, 3
      %p309 = por %p307, %p308
      %p311 = scmp.ne.s32.totalorder %s294, %s310
      %p312 = scmp.eq.s32.totalorder %s66, 0
      %p313 = por %p311, %p312
      %s314 = ssub.s32 %s68, %s75
      %p315 = scmp.eq.s32.totalorder %s314, 0
      %s317 = sadd.s32 %s316, 1
      %s318 = scalar_select %p315, %s316, %s317
      %p321 = pneg %p315
      %p322 = scmp.eq.s32.totalorder %s60, 3
      %p323 = por %p321, %p322
      %p324 = scmp.ne.s32.totalorder %s316, %s319
      %p325 = scmp.eq.s32.totalorder %s60, 0
      %p326 = por %p324, %p325
      %p327 = scmp.ne.s32.totalorder %s316, %s319
      %p328 = scmp.eq.s32.totalorder %s65, 3
      %p329 = por %p327, %p328
      %p330 = scmp.ne.s32.totalorder %s319, %s320
      %p331 = scmp.eq.s32.totalorder %s65, 0
      %p332 = por %p330, %p331
      %p333 = scmp.ne.s32.totalorder %s319, %s320
      %p334 = scmp.eq.s32.totalorder %s66, 3
      %p335 = por %p333, %p334
      %p337 = scmp.ne.s32.totalorder %s320, %s336
      %p338 = scmp.eq.s32.totalorder %s66, 0
      %p339 = por %p337, %p338
      %s340 = ssub.s32 %s68, %s75
      %p341 = scmp.eq.s32.totalorder %s340, 0
      %s343 = sadd.s32 %s342, 1
      %s344 = scalar_select %p341, %s342, %s343
      %p347 = pneg %p341
      %p348 = scmp.eq.s32.totalorder %s60, 3
      %p349 = por %p347, %p348
      %p350 = scmp.ne.s32.totalorder %s342, %s345
      %p351 = scmp.eq.s32.totalorder %s60, 0
      %p352 = por %p350, %p351
      %p353 = scmp.ne.s32.totalorder %s342, %s345
      %p354 = scmp.eq.s32.totalorder %s65, 3
      %p355 = por %p353, %p354
      %p356 = scmp.ne.s32.totalorder %s345, %s346
      %p357 = scmp.eq.s32.totalorder %s65, 0
      %p358 = por %p356, %p357
      %p359 = scmp.ne.s32.totalorder %s345, %s346
      %p360 = scmp.eq.s32.totalorder %s66, 3
      %p361 = por %p359, %p360
      %p363 = scmp.ne.s32.totalorder %s346, %s362
      %p364 = scmp.eq.s32.totalorder %s66, 0
      %p365 = por %p363, %p364
      %s366 = ssub.s32 %s68, %s75
      %p367 = scmp.eq.s32.totalorder %s366, 0
      %s369 = sadd.s32 %s368, 1
      %s370 = scalar_select %p367, %s368, %s369
      %p373 = pneg %p367
      %p374 = scmp.eq.s32.totalorder %s60, 3
      %p375 = por %p373, %p374
      %p376 = scmp.ne.s32.totalorder %s368, %s371
      %p377 = scmp.eq.s32.totalorder %s60, 0
      %p378 = por %p376, %p377
      %p379 = scmp.ne.s32.totalorder %s368, %s371
      %p380 = scmp.eq.s32.totalorder %s65, 3
      %p381 = por %p379, %p380
      %p382 = scmp.ne.s32.totalorder %s371, %s372
      %p383 = scmp.eq.s32.totalorder %s65, 0
      %p384 = por %p382, %p383
      %p385 = scmp.ne.s32.totalorder %s371, %s372
      %p386 = scmp.eq.s32.totalorder %s66, 3
      %p387 = por %p385, %p386
      %p389 = scmp.ne.s32.totalorder %s372, %s388
      %p390 = scmp.eq.s32.totalorder %s66, 0
      %p391 = por %p389, %p390
      %s392 = ssub.s32 %s68, %s75
      %p393 = scmp.eq.s32.totalorder %s392, 0
      %s395 = sadd.s32 %s394, 1
      %s396 = scalar_select %p393, %s394, %s395
      %p399 = pneg %p393
      %p400 = scmp.eq.s32.totalorder %s60, 3
      %p401 = por %p399, %p400
      %p402 = scmp.ne.s32.totalorder %s394, %s397
      %p403 = scmp.eq.s32.totalorder %s60, 0
      %p404 = por %p402, %p403
      %p405 = scmp.ne.s32.totalorder %s394, %s397
      %p406 = scmp.eq.s32.totalorder %s65, 3
      %p407 = por %p405, %p406
      %p408 = scmp.ne.s32.totalorder %s397, %s398
      %p409 = scmp.eq.s32.totalorder %s65, 0
      %p410 = por %p408, %p409
      %p411 = scmp.ne.s32.totalorder %s397, %s398
      %p412 = scmp.eq.s32.totalorder %s66, 3
      %p413 = por %p411, %p412
      %p415 = scmp.ne.s32.totalorder %s398, %s414
      %p416 = scmp.eq.s32.totalorder %s66, 0
      %p417 = por %p415, %p416
      %s418 = ssub.s32 %s68, %s75
      %p419 = scmp.eq.s32.totalorder %s418, 0
      %s421 = sadd.s32 %s420, 1
      %s422 = scalar_select %p419, %s420, %s421
      %p425 = pneg %p419
      %p426 = scmp.eq.s32.totalorder %s60, 3
      %p427 = por %p425, %p426
      %p428 = scmp.ne.s32.totalorder %s420, %s423
      %p429 = scmp.eq.s32.totalorder %s60, 0
      %p430 = por %p428, %p429
      %p431 = scmp.ne.s32.totalorder %s420, %s423
      %p432 = scmp.eq.s32.totalorder %s65, 3
      %p433 = por %p431, %p432
      %p434 = scmp.ne.s32.totalorder %s423, %s424
      %p435 = scmp.eq.s32.totalorder %s65, 0
      %p436 = por %p434, %p435
      %p437 = scmp.ne.s32.totalorder %s423, %s424
      %p438 = scmp.eq.s32.totalorder %s66, 3
      %p439 = por %p437, %p438
      %p441 = scmp.ne.s32.totalorder %s424, %s440
      %p442 = scmp.eq.s32.totalorder %s66, 0
      %p443 = por %p441, %p442
      %s444 = ssub.s32 %s68, %s75
      %p445 = scmp.eq.s32.totalorder %s444, 0
      %s447 = sadd.s32 %s446, 1
      %s448 = scalar_select %p445, %s446, %s447
      %p451 = pneg %p445
      %p452 = scmp.eq.s32.totalorder %s60, 3
      %p453 = por %p451, %p452
      %p454 = scmp.ne.s32.totalorder %s446, %s449
      %p455 = scmp.eq.s32.totalorder %s60, 0
      %p456 = por %p454, %p455
      %p457 = scmp.ne.s32.totalorder %s446, %s449
      %p458 = scmp.eq.s32.totalorder %s65, 3
      %p459 = por %p457, %p458
      %p460 = scmp.ne.s32.totalorder %s449, %s450
      %p461 = scmp.eq.s32.totalorder %s65, 0
      %p462 = por %p460, %p461
      %p463 = scmp.ne.s32.totalorder %s449, %s450
      %p464 = scmp.eq.s32.totalorder %s66, 3
      %p465 = por %p463, %p464
      %p467 = scmp.ne.s32.totalorder %s450, %s466
      %p468 = scmp.eq.s32.totalorder %s66, 0
      %p469 = por %p467, %p468
      %s470 = ssub.s32 %s68, %s75
      %p471 = scmp.eq.s32.totalorder %s470, 0
      %s473 = sadd.s32 %s472, 1
      %s474 = scalar_select %p471, %s472, %s473
      %p477 = pneg %p471
      %p478 = scmp.eq.s32.totalorder %s60, 3
      %p479 = por %p477, %p478
      %p480 = scmp.ne.s32.totalorder %s472, %s475
      %p481 = scmp.eq.s32.totalorder %s60, 0
      %p482 = por %p480, %p481
      %p483 = scmp.ne.s32.totalorder %s472, %s475
      %p484 = scmp.eq.s32.totalorder %s65, 3
      %p485 = por %p483, %p484
      %p486 = scmp.ne.s32.totalorder %s475, %s476
      %p487 = scmp.eq.s32.totalorder %s65, 0
      %p488 = por %p486, %p487
      %p489 = scmp.ne.s32.totalorder %s475, %s476
      %p490 = scmp.eq.s32.totalorder %s66, 3
      %p491 = por %p489, %p490
      %p493 = scmp.ne.s32.totalorder %s476, %s492
      %p494 = scmp.eq.s32.totalorder %s66, 0
      %p495 = por %p493, %p494
      %s496 = ssub.s32 %s68, %s75
      %p497 = scmp.eq.s32.totalorder %s496, 0
      %s499 = sadd.s32 %s498, 1
      %s500 = scalar_select %p497, %s498, %s499
      %p503 = pneg %p497
      %p504 = scmp.eq.s32.totalorder %s60, 3
      %p505 = por %p503, %p504
      %p506 = scmp.ne.s32.totalorder %s498, %s501
      %p507 = scmp.eq.s32.totalorder %s60, 0
      %p508 = por %p506, %p507
      %p509 = scmp.ne.s32.totalorder %s498, %s501
      %p510 = scmp.eq.s32.totalorder %s65, 3
      %p511 = por %p509, %p510
      %p512 = scmp.ne.s32.totalorder %s501, %s502
      %p513 = scmp.eq.s32.totalorder %s65, 0
      %p514 = por %p512, %p513
      %p515 = scmp.ne.s32.totalorder %s501, %s502
      %p516 = scmp.eq.s32.totalorder %s66, 3
      %p517 = por %p515, %p516
      %p519 = scmp.ne.s32.totalorder %s502, %s518
      %p520 = scmp.eq.s32.totalorder %s66, 0
      %p521 = por %p519, %p520
      %s522 = ssub.s32 %s68, %s75
      %p523 = scmp.eq.s32.totalorder %s522, 0
      %s525 = sadd.s32 %s524, 1
      %s526 = scalar_select %p523, %s524, %s525
      %p529 = pneg %p523
      %p530 = scmp.eq.s32.totalorder %s60, 3
      %p531 = por %p529, %p530
      %p532 = scmp.ne.s32.totalorder %s524, %s527
      %p533 = scmp.eq.s32.totalorder %s60, 0
      %p534 = por %p532, %p533
      %p535 = scmp.ne.s32.totalorder %s524, %s527
      %p536 = scmp.eq.s32.totalorder %s65, 3
      %p537 = por %p535, %p536
      %p538 = scmp.ne.s32.totalorder %s527, %s528
      %p539 = scmp.eq.s32.totalorder %s65, 0
      %p540 = por %p538, %p539
      %p541 = scmp.ne.s32.totalorder %s527, %s528
      %p542 = scmp.eq.s32.totalorder %s66, 3
      %p543 = por %p541, %p542
      %p545 = scmp.ne.s32.totalorder %s528, %s544
      %p546 = scmp.eq.s32.totalorder %s66, 0
      %p547 = por %p545, %p546
      %s549 = sadd.s32 %s548, 1
      %p552 = scmp.eq.s32.totalorder %s60, 3
      %p553 = scmp.ne.s32.totalorder %s548, %s550
      %p554 = scmp.eq.s32.totalorder %s60, 0
      %p555 = por %p553, %p554
      %p556 = scmp.ne.s32.totalorder %s548, %s550
      %p557 = scmp.eq.s32.totalorder %s65, 3
      %p558 = por %p556, %p557
      %p559 = scmp.ne.s32.totalorder %s550, %s551
      %p560 = scmp.eq.s32.totalorder %s65, 0
      %p561 = por %p559, %p560
      %p562 = scmp.ne.s32.totalorder %s550, %s551
      %p563 = scmp.eq.s32.totalorder %s66, 3
      %p564 = por %p562, %p563
      %p566 = scmp.ne.s32.totalorder %s551, %s565
      %p567 = scmp.eq.s32.totalorder %s66, 0
      %p568 = por %p566, %p567
      %s570 = sadd.s32 %s569, 1
      %p573 = scmp.eq.s32.totalorder %s60, 3
      %p574 = scmp.ne.s32.totalorder %s569, %s571
      %p575 = scmp.eq.s32.totalorder %s60, 0
      %p576 = por %p574, %p575
      %p577 = scmp.ne.s32.totalorder %s569, %s571
      %p578 = scmp.eq.s32.totalorder %s65, 3
      %p579 = por %p577, %p578
      %p580 = scmp.ne.s32.totalorder %s571, %s572
      %p581 = scmp.eq.s32.totalorder %s65, 0
      %p582 = por %p580, %p581
      %p583 = scmp.ne.s32.totalorder %s571, %s572
      %p584 = scmp.eq.s32.totalorder %s66, 3
      %p585 = por %p583, %p584
      %p587 = scmp.ne.s32.totalorder %s572, %s586
      %p588 = scmp.eq.s32.totalorder %s66, 0
      %p589 = por %p587, %p588
      %s590 = ssub.s32 %s67, %s79
      %p591 = scmp.eq.s32.totalorder %s590, 0
      %s593 = sadd.s32 %s592, 1
      %s594 = scalar_select %p591, %s592, %s593
      %p597 = pneg %p591
      %p598 = scmp.eq.s32.totalorder %s60, 3
      %p599 = por %p597, %p598
      %p600 = scmp.ne.s32.totalorder %s592, %s595
      %p601 = scmp.eq.s32.totalorder %s60, 0
      %p602 = por %p600, %p601
      %p603 = scmp.ne.s32.totalorder %s592, %s595
      %p604 = scmp.eq.s32.totalorder %s65, 3
      %p605 = por %p603, %p604
      %p606 = scmp.ne.s32.totalorder %s595, %s596
      %p607 = scmp.eq.s32.totalorder %s65, 0
      %p608 = por %p606, %p607
      %p609 = scmp.ne.s32.totalorder %s595, %s596
      %p610 = scmp.eq.s32.totalorder %s66, 3
      %p611 = por %p609, %p610
      %p613 = scmp.ne.s32.totalorder %s596, %s612
      %p614 = scmp.eq.s32.totalorder %s66, 0
      %p615 = por %p613, %p614
      %p616 = scmp.le.s32.totalorder 1, %s60
      %p617 = scmp.lt.s32.totalorder %s60, 5
      %p618 = pnand %p616, %p617
      %p619 = pneg %p618
      // Predicated region
      $region9: #{tpu_custom_call.1} parent=5 // pred_check
        _
      $region10: #{tpu_custom_call.1} parent=5 // pred_check_branch
        %621 = sbr.rel (%p618) target = $region12
      $region11: #{tpu_custom_call.1} parent=5 // pred_region
        %s622 = ssub.s32 %s60, 1
        // Predicated region
        $region13: #{tpu_custom_call.1} parent=11 // pred_check
          %p623 = pneg %p561
        $region14: #{tpu_custom_call.1} parent=11 // pred_check_branch
          %625 = sbr.rel (%p623) target = $region16
        $region15: #{tpu_custom_call.1} parent=11 // pred_region
          %s627 = ssub.s32 16, 16
          %628 = vsyncadd [#allocation31], %s627
          %s630 = sshll.u32 [#allocation32], 4
          %s631 = int_to_ptr.vmem [resolvable:$true] %s630
          %633 = dma.hbm_to_vmem [thread:$0]  %s18, 16, %s631, [#allocation31]
        $region16: #{tpu_custom_call.1} parent=11 // pred_fallthru
          _
        // Predicated region
        $region17: #{tpu_custom_call.1} parent=11 // pred_check
          %p634 = pneg %p582
        $region18: #{tpu_custom_call.1} parent=11 // pred_check_branch
          %636 = sbr.rel (%p634) target = $region20
        $region19: #{tpu_custom_call.1} parent=11 // pred_region
          %s638 = ssub.s32 16, 16
          %639 = vsyncadd [#allocation34], %s638
          %s641 = sshll.u32 [#allocation33], 4
          %s642 = int_to_ptr.vmem [resolvable:$true] %s641
          %644 = dma.hbm_to_vmem [thread:$0]  %s19, 16, %s642, [#allocation34]
        $region20: #{tpu_custom_call.1} parent=11 // pred_fallthru
          _
      $region12: #{tpu_custom_call.1} parent=5 // pred_fallthru
        _
      %p645 = scmp.lt.s32.totalorder %s60, 4
      // Predicated region
      $region21: #{tpu_custom_call.1} parent=5 // pred_check
        %p646 = pneg %p645
      $region22: #{tpu_custom_call.1} parent=5 // pred_check_branch
        %648 = sbr.rel (%p646) target = $region24
      $region23: #{tpu_custom_call.1} parent=5 // pred_region
        // Predicated region
        $region25: #{tpu_custom_call.1} parent=23 // pred_check
          %p649 = pneg %p92
        $region26: #{tpu_custom_call.1} parent=23 // pred_check_branch
          %651 = sbr.rel (%p649) target = $region28
        $region27: #{tpu_custom_call.1} parent=23 // pred_region
          %s652 = sand.u32 %s82, 1
          %s653 = scalar_lea.sflag [#allocation4], %s652
          %s654 = sand.u32 %s82, 1
          %s655 = smul.addr %s654, 8
          %s656 = scalar_lea.vmem [#allocation3], %s655
          %s658 = ssub.s32 128, 128
          %659 = vsyncadd %s653, %s658
          %s660 = smul.addr %s67, 128
          %s661 = scalar_lea.hbm %s0, %s660
          %s663 = sshll.u32 %s656, 4
          %s664 = int_to_ptr.vmem [resolvable:$true] %s663
          %666 = dma.hbm_to_vmem [thread:$0]  %s661, 128, %s664, %s653
        $region28: #{tpu_custom_call.1} parent=23 // pred_fallthru
          _
        // Predicated region
        $region29: #{tpu_custom_call.1} parent=23 // pred_check
          %p667 = pneg %p118
        $region30: #{tpu_custom_call.1} parent=23 // pred_check_branch
          %669 = sbr.rel (%p667) target = $region32
        $region31: #{tpu_custom_call.1} parent=23 // pred_region
          %s670 = sand.u32 %s60, 1
          %s671 = scalar_lea.sflag [#allocation7], %s670
          %s672 = sand.u32 %s108, 1
          %s673 = scalar_lea.vmem [#allocation6], %s672
          %s675 = ssub.s32 16, 16
          %676 = vsyncadd %s671, %s675
          %s677 = smul.addr %s67, 16
          %s678 = scalar_lea.hbm %s1, %s677
          %s680 = sshll.u32 %s673, 4
          %s681 = int_to_ptr.vmem [resolvable:$true] %s680
          %683 = dma.hbm_to_vmem [thread:$0]  %s678, 16, %s681, %s671
        $region32: #{tpu_custom_call.1} parent=23 // pred_fallthru
          _
        // Predicated region
        $region33: #{tpu_custom_call.1} parent=23 // pred_check
          %p684 = pneg %p144
        $region34: #{tpu_custom_call.1} parent=23 // pred_check_branch
          %686 = sbr.rel (%p684) target = $region36
        $region35: #{tpu_custom_call.1} parent=23 // pred_region
          %s687 = sand.u32 %s60, 1
          %s688 = scalar_lea.sflag [#allocation7], %s687
          %s689 = sand.u32 %s134, 1
          %s690 = scalar_lea.vmem [#allocation8], %s689
          %s692 = ssub.s32 16, 16
          %693 = vsyncadd %s688, %s692
          %s694 = smul.addr %s68, 16
          %s695 = scalar_lea.hbm %s2, %s694
          %s697 = sshll.u32 %s690, 4
          %s698 = int_to_ptr.vmem [resolvable:$true] %s697
          %700 = dma.hbm_to_vmem [thread:$0]  %s695, 16, %s698, %s688
        $region36: #{tpu_custom_call.1} parent=23 // pred_fallthru
          _
        // Predicated region
        $region37: #{tpu_custom_call.1} parent=23 // pred_check
          %p701 = pneg %p170
        $region38: #{tpu_custom_call.1} parent=23 // pred_check_branch
          %703 = sbr.rel (%p701) target = $region40
        $region39: #{tpu_custom_call.1} parent=23 // pred_region
          %s704 = sand.u32 %s60, 1
          %s705 = scalar_lea.sflag [#allocation10], %s704
          %s706 = sand.u32 %s160, 1
          %s707 = scalar_lea.vmem [#allocation9], %s706
          %s709 = ssub.s32 16, 16
          %710 = vsyncadd %s705, %s709
          %s711 = smul.addr %s68, 16
          %s712 = scalar_lea.hbm %s3, %s711
          %s714 = sshll.u32 %s707, 4
          %s715 = int_to_ptr.vmem [resolvable:$true] %s714
          %717 = dma.hbm_to_vmem [thread:$0]  %s712, 16, %s715, %s705
        $region40: #{tpu_custom_call.1} parent=23 // pred_fallthru
          _
        // Predicated region
        $region41: #{tpu_custom_call.1} parent=23 // pred_check
          %p718 = pneg %p196
        $region42: #{tpu_custom_call.1} parent=23 // pred_check_branch
          %720 = sbr.rel (%p718) target = $region44
        $region43: #{tpu_custom_call.1} parent=23 // pred_region
          %s721 = sand.u32 %s60, 1
          %s722 = scalar_lea.sflag [#allocation10], %s721
          %s723 = sand.u32 %s186, 1
          %s724 = smul.addr %s723, 16
          %s725 = scalar_lea.vmem [#allocation11], %s724
          %s727 = ssub.s32 256, 256
          %728 = vsyncadd %s722, %s727
          %s729 = smul.addr %s68, 4
          %s730 = smul.addr %s729, 64
          %s731 = scalar_lea.hbm %s4, %s730
          %s732 = sshll.u32 %s725, 4
          %s733 = int_to_ptr.vmem [resolvable:$true] %s732
          %738 = dma.hbm_to_vmem [thread:$0]  %s731, 256, %s733, %s722, 64, 64, 4
        $region44: #{tpu_custom_call.1} parent=23 // pred_fallthru
          _
        // Predicated region
        $region45: #{tpu_custom_call.1} parent=23 // pred_check
          %p739 = pneg %p222
        $region46: #{tpu_custom_call.1} parent=23 // pred_check_branch
          %741 = sbr.rel (%p739) target = $region48
        $region47: #{tpu_custom_call.1} parent=23 // pred_region
          %s742 = sand.u32 %s60, 1
          %s743 = scalar_lea.sflag [#allocation13], %s742
          %s744 = sand.u32 %s212, 1
          %s745 = scalar_lea.vmem [#allocation12], %s744
          %s747 = ssub.s32 16, 16
          %748 = vsyncadd %s743, %s747
          %s749 = smul.addr %s68, 16
          %s750 = scalar_lea.hbm %s5, %s749
          %s752 = sshll.u32 %s745, 4
          %s753 = int_to_ptr.vmem [resolvable:$true] %s752
          %755 = dma.hbm_to_vmem [thread:$0]  %s750, 16, %s753, %s743
        $region48: #{tpu_custom_call.1} parent=23 // pred_fallthru
          _
        // Predicated region
        $region49: #{tpu_custom_call.1} parent=23 // pred_check
          %p756 = pneg %p248
        $region50: #{tpu_custom_call.1} parent=23 // pred_check_branch
          %758 = sbr.rel (%p756) target = $region52
        $region51: #{tpu_custom_call.1} parent=23 // pred_region
          %s759 = sand.u32 %s60, 1
          %s760 = scalar_lea.sflag [#allocation13], %s759
          %s761 = sand.u32 %s238, 1
          %s762 = smul.addr %s761, 16
          %s763 = scalar_lea.vmem [#allocation14], %s762
          %s765 = ssub.s32 256, 256
          %766 = vsyncadd %s760, %s765
          %s767 = smul.addr %s68, 4
          %s768 = smul.addr %s767, 64
          %s769 = scalar_lea.hbm %s6, %s768
          %s770 = sshll.u32 %s763, 4
          %s771 = int_to_ptr.vmem [resolvable:$true] %s770
          %776 = dma.hbm_to_vmem [thread:$0]  %s769, 256, %s771, %s760, 64, 64, 4
        $region52: #{tpu_custom_call.1} parent=23 // pred_fallthru
          _
        // Predicated region
        $region53: #{tpu_custom_call.1} parent=23 // pred_check
          %p777 = pneg %p274
        $region54: #{tpu_custom_call.1} parent=23 // pred_check_branch
          %779 = sbr.rel (%p777) target = $region56
        $region55: #{tpu_custom_call.1} parent=23 // pred_region
          %s780 = sand.u32 %s60, 1
          %s781 = scalar_lea.sflag [#allocation16], %s780
          %s782 = sand.u32 %s264, 1
          %s783 = scalar_lea.vmem [#allocation15], %s782
          %s785 = ssub.s32 16, 16
          %786 = vsyncadd %s781, %s785
          %s787 = smul.addr %s68, 16
          %s788 = scalar_lea.hbm %s7, %s787
          %s790 = sshll.u32 %s783, 4
          %s791 = int_to_ptr.vmem [resolvable:$true] %s790
          %793 = dma.hbm_to_vmem [thread:$0]  %s788, 16, %s791, %s781
        $region56: #{tpu_custom_call.1} parent=23 // pred_fallthru
          _
        // Predicated region
        $region57: #{tpu_custom_call.1} parent=23 // pred_check
          %p794 = pneg %p300
        $region58: #{tpu_custom_call.1} parent=23 // pred_check_branch
          %796 = sbr.rel (%p794) target = $region60
        $region59: #{tpu_custom_call.1} parent=23 // pred_region
          %s797 = sand.u32 %s60, 1
          %s798 = scalar_lea.sflag [#allocation16], %s797
          %s799 = sand.u32 %s290, 1
          %s800 = smul.addr %s799, 16
          %s801 = scalar_lea.vmem [#allocation17], %s800
          %s803 = ssub.s32 256, 256
          %804 = vsyncadd %s798, %s803
          %s805 = smul.addr %s68, 4
          %s806 = smul.addr %s805, 64
          %s807 = scalar_lea.hbm %s8, %s806
          %s808 = sshll.u32 %s801, 4
          %s809 = int_to_ptr.vmem [resolvable:$true] %s808
          %814 = dma.hbm_to_vmem [thread:$0]  %s807, 256, %s809, %s798, 64, 64, 4
        $region60: #{tpu_custom_call.1} parent=23 // pred_fallthru
          _
        // Predicated region
        $region61: #{tpu_custom_call.1} parent=23 // pred_check
          %p815 = pneg %p326
        $region62: #{tpu_custom_call.1} parent=23 // pred_check_branch
          %817 = sbr.rel (%p815) target = $region64
        $region63: #{tpu_custom_call.1} parent=23 // pred_region
          %s818 = sand.u32 %s60, 1
          %s819 = scalar_lea.sflag [#allocation19], %s818
          %s820 = sand.u32 %s316, 1
          %s821 = scalar_lea.vmem [#allocation18], %s820
          %s823 = ssub.s32 16, 16
          %824 = vsyncadd %s819, %s823
          %s825 = smul.addr %s68, 16
          %s826 = scalar_lea.hbm %s9, %s825
          %s828 = sshll.u32 %s821, 4
          %s829 = int_to_ptr.vmem [resolvable:$true] %s828
          %831 = dma.hbm_to_vmem [thread:$0]  %s826, 16, %s829, %s819
        $region64: #{tpu_custom_call.1} parent=23 // pred_fallthru
          _
        // Predicated region
        $region65: #{tpu_custom_call.1} parent=23 // pred_check
          %p832 = pneg %p352
        $region66: #{tpu_custom_call.1} parent=23 // pred_check_branch
          %834 = sbr.rel (%p832) target = $region68
        $region67: #{tpu_custom_call.1} parent=23 // pred_region
          %s835 = sand.u32 %s60, 1
          %s836 = scalar_lea.sflag [#allocation19], %s835
          %s837 = sand.u32 %s342, 1
          %s838 = smul.addr %s837, 16
          %s839 = scalar_lea.vmem [#allocation20], %s838
          %s841 = ssub.s32 256, 256
          %842 = vsyncadd %s836, %s841
          %s843 = smul.addr %s68, 4
          %s844 = smul.addr %s843, 64
          %s845 = scalar_lea.hbm %s10, %s844
          %s846 = sshll.u32 %s839, 4
          %s847 = int_to_ptr.vmem [resolvable:$true] %s846
          %852 = dma.hbm_to_vmem [thread:$0]  %s845, 256, %s847, %s836, 64, 64, 4
        $region68: #{tpu_custom_call.1} parent=23 // pred_fallthru
          _
        // Predicated region
        $region69: #{tpu_custom_call.1} parent=23 // pred_check
          %p853 = pneg %p378
        $region70: #{tpu_custom_call.1} parent=23 // pred_check_branch
          %855 = sbr.rel (%p853) target = $region72
        $region71: #{tpu_custom_call.1} parent=23 // pred_region
          %s856 = sand.u32 %s60, 1
          %s857 = scalar_lea.sflag [#allocation22], %s856
          %s858 = sand.u32 %s368, 1
          %s859 = scalar_lea.vmem [#allocation21], %s858
          %s861 = ssub.s32 16, 16
          %862 = vsyncadd %s857, %s861
          %s863 = smul.addr %s68, 16
          %s864 = scalar_lea.hbm %s11, %s863
          %s866 = sshll.u32 %s859, 4
          %s867 = int_to_ptr.vmem [resolvable:$true] %s866
          %869 = dma.hbm_to_vmem [thread:$0]  %s864, 16, %s867, %s857
        $region72: #{tpu_custom_call.1} parent=23 // pred_fallthru
          _
        // Predicated region
        $region73: #{tpu_custom_call.1} parent=23 // pred_check
          %p870 = pneg %p404
        $region74: #{tpu_custom_call.1} parent=23 // pred_check_branch
          %872 = sbr.rel (%p870) target = $region76
        $region75: #{tpu_custom_call.1} parent=23 // pred_region
          %s873 = sand.u32 %s60, 1
          %s874 = scalar_lea.sflag [#allocation22], %s873
          %s875 = sand.u32 %s394, 1
          %s876 = scalar_lea.vmem [#allocation23], %s875
          %s878 = ssub.s32 16, 16
          %879 = vsyncadd %s874, %s878
          %s880 = smul.addr %s68, 16
          %s881 = scalar_lea.hbm %s12, %s880
          %s883 = sshll.u32 %s876, 4
          %s884 = int_to_ptr.vmem [resolvable:$true] %s883
          %886 = dma.hbm_to_vmem [thread:$0]  %s881, 16, %s884, %s874
        $region76: #{tpu_custom_call.1} parent=23 // pred_fallthru
          _
        // Predicated region
        $region77: #{tpu_custom_call.1} parent=23 // pred_check
          %p887 = pneg %p430
        $region78: #{tpu_custom_call.1} parent=23 // pred_check_branch
          %889 = sbr.rel (%p887) target = $region80
        $region79: #{tpu_custom_call.1} parent=23 // pred_region
          %s890 = sand.u32 %s60, 1
          %s891 = scalar_lea.sflag [#allocation25], %s890
          %s892 = sand.u32 %s420, 1
          %s893 = scalar_lea.vmem [#allocation24], %s892
          %s895 = ssub.s32 16, 16
          %896 = vsyncadd %s891, %s895
          %s897 = smul.addr %s68, 16
          %s898 = scalar_lea.hbm %s13, %s897
          %s900 = sshll.u32 %s893, 4
          %s901 = int_to_ptr.vmem [resolvable:$true] %s900
          %903 = dma.hbm_to_vmem [thread:$0]  %s898, 16, %s901, %s891
        $region80: #{tpu_custom_call.1} parent=23 // pred_fallthru
          _
        // Predicated region
        $region81: #{tpu_custom_call.1} parent=23 // pred_check
          %p904 = pneg %p456
        $region82: #{tpu_custom_call.1} parent=23 // pred_check_branch
          %906 = sbr.rel (%p904) target = $region84
        $region83: #{tpu_custom_call.1} parent=23 // pred_region
          %s907 = sand.u32 %s60, 1
          %s908 = scalar_lea.sflag [#allocation25], %s907
          %s909 = sand.u32 %s446, 1
          %s910 = smul.addr %s909, 16
          %s911 = scalar_lea.vmem [#allocation26], %s910
          %s913 = ssub.s32 256, 256
          %914 = vsyncadd %s908, %s913
          %s915 = smul.addr %s68, 4
          %s916 = smul.addr %s915, 64
          %s917 = scalar_lea.hbm %s14, %s916
          %s918 = sshll.u32 %s911, 4
          %s919 = int_to_ptr.vmem [resolvable:$true] %s918
          %924 = dma.hbm_to_vmem [thread:$0]  %s917, 256, %s919, %s908, 64, 64, 4
        $region84: #{tpu_custom_call.1} parent=23 // pred_fallthru
          _
        // Predicated region
        $region85: #{tpu_custom_call.1} parent=23 // pred_check
          %p925 = pneg %p482
        $region86: #{tpu_custom_call.1} parent=23 // pred_check_branch
          %927 = sbr.rel (%p925) target = $region88
        $region87: #{tpu_custom_call.1} parent=23 // pred_region
          %s928 = sand.u32 %s60, 1
          %s929 = scalar_lea.sflag [#allocation28], %s928
          %s930 = sand.u32 %s472, 1
          %s931 = scalar_lea.vmem [#allocation27], %s930
          %s933 = ssub.s32 16, 16
          %934 = vsyncadd %s929, %s933
          %s935 = smul.addr %s68, 16
          %s936 = scalar_lea.hbm %s15, %s935
          %s938 = sshll.u32 %s931, 4
          %s939 = int_to_ptr.vmem [resolvable:$true] %s938
          %941 = dma.hbm_to_vmem [thread:$0]  %s936, 16, %s939, %s929
        $region88: #{tpu_custom_call.1} parent=23 // pred_fallthru
          _
        // Predicated region
        $region89: #{tpu_custom_call.1} parent=23 // pred_check
          %p942 = pneg %p508
        $region90: #{tpu_custom_call.1} parent=23 // pred_check_branch
          %944 = sbr.rel (%p942) target = $region92
        $region91: #{tpu_custom_call.1} parent=23 // pred_region
          %s945 = sand.u32 %s60, 1
          %s946 = scalar_lea.sflag [#allocation28], %s945
          %s947 = sand.u32 %s498, 1
          %s948 = smul.addr %s947, 32
          %s949 = scalar_lea.vmem [#allocation29], %s948
          %s951 = ssub.s32 512, 512
          %952 = vsyncadd %s946, %s951
          %s953 = smul.addr %s68, 8
          %s954 = smul.addr %s953, 64
          %s955 = scalar_lea.hbm %s16, %s954
          %s956 = sshll.u32 %s949, 4
          %s957 = int_to_ptr.vmem [resolvable:$true] %s956
          %962 = dma.hbm_to_vmem [thread:$0]  %s955, 512, %s957, %s946, 64, 64, 4
        $region92: #{tpu_custom_call.1} parent=23 // pred_fallthru
          _
        // Predicated region
        $region93: #{tpu_custom_call.1} parent=23 // pred_check
          %p963 = pneg %p534
        $region94: #{tpu_custom_call.1} parent=23 // pred_check_branch
          %965 = sbr.rel (%p963) target = $region96
        $region95: #{tpu_custom_call.1} parent=23 // pred_region
          %s966 = sand.u32 %s60, 1
          %s967 = scalar_lea.sflag [#allocation31], %s966
          %s968 = sand.u32 %s524, 1
          %s969 = scalar_lea.vmem [#allocation30], %s968
          %s971 = ssub.s32 16, 16
          %972 = vsyncadd %s967, %s971
          %s973 = smul.addr %s68, 16
          %s974 = scalar_lea.hbm %s17, %s973
          %s976 = sshll.u32 %s969, 4
          %s977 = int_to_ptr.vmem [resolvable:$true] %s976
          %979 = dma.hbm_to_vmem [thread:$0]  %s974, 16, %s977, %s967
        $region96: #{tpu_custom_call.1} parent=23 // pred_fallthru
          _
      $region24: #{tpu_custom_call.1} parent=5 // pred_fallthru
        _
      %p980 = scmp.le.s32.totalorder 1, %s60
      %p981 = scmp.lt.s32.totalorder %s60, 5
      %p982 = pnand %p980, %p981
      %p983 = pneg %p982
      // Predicated region
      $region97: #{tpu_custom_call.1} parent=5 // pred_check
        _
      $region98: #{tpu_custom_call.1} parent=5 // pred_check_branch
        %985 = sbr.rel (%p982) target = $region100
      $region99: #{tpu_custom_call.1} parent=5 // pred_region
        %s986 = ssub.s32 %s60, 1
        %s987 = sand.u32 %s85, 1
        %s988 = scalar_lea.sflag [#allocation4], %s987
        %s989 = sand.u32 %s85, 1
        %s990 = smul.addr %s989, 8
        %s991 = scalar_lea.vmem [#allocation3], %s990
        // Predicated region
        $region101: #{tpu_custom_call.1} parent=99 // pred_check
          %p992 = pneg %p98
        $region102: #{tpu_custom_call.1} parent=99 // pred_check_branch
          %994 = sbr.rel (%p992) target = $region104
        $region103: #{tpu_custom_call.1} parent=99 // pred_region
          %995 = dma.done %s988, 128
        $region104: #{tpu_custom_call.1} parent=99 // pred_fallthru
          _
        %s996 = sand.u32 %s65, 1
        %s997 = scalar_lea.sflag [#allocation7], %s996
        %s998 = sand.u32 %s111, 1
        %s999 = scalar_lea.vmem [#allocation6], %s998
        // Predicated region
        $region105: #{tpu_custom_call.1} parent=99 // pred_check
          %p1000 = pneg %p124
        $region106: #{tpu_custom_call.1} parent=99 // pred_check_branch
          %1002 = sbr.rel (%p1000) target = $region108
        $region107: #{tpu_custom_call.1} parent=99 // pred_region
          %1003 = dma.done %s997, 16
        $region108: #{tpu_custom_call.1} parent=99 // pred_fallthru
          _
        %s1004 = sand.u32 %s65, 1
        %s1005 = scalar_lea.sflag [#allocation7], %s1004
        %s1006 = sand.u32 %s137, 1
        %s1007 = scalar_lea.vmem [#allocation8], %s1006
        // Predicated region
        $region109: #{tpu_custom_call.1} parent=99 // pred_check
          %p1008 = pneg %p150
        $region110: #{tpu_custom_call.1} parent=99 // pred_check_branch
          %1010 = sbr.rel (%p1008) target = $region112
        $region111: #{tpu_custom_call.1} parent=99 // pred_region
          %1011 = dma.done %s1005, 16
        $region112: #{tpu_custom_call.1} parent=99 // pred_fallthru
          _
        %s1012 = sand.u32 %s65, 1
        %s1013 = scalar_lea.sflag [#allocation10], %s1012
        %s1014 = sand.u32 %s163, 1
        %s1015 = scalar_lea.vmem [#allocation9], %s1014
        // Predicated region
        $region113: #{tpu_custom_call.1} parent=99 // pred_check
          %p1016 = pneg %p176
        $region114: #{tpu_custom_call.1} parent=99 // pred_check_branch
          %1018 = sbr.rel (%p1016) target = $region116
        $region115: #{tpu_custom_call.1} parent=99 // pred_region
          %1019 = dma.done %s1013, 16
        $region116: #{tpu_custom_call.1} parent=99 // pred_fallthru
          _
        %s1020 = sand.u32 %s65, 1
        %s1021 = scalar_lea.sflag [#allocation10], %s1020
        %s1022 = sand.u32 %s189, 1
        %s1023 = smul.addr %s1022, 16
        %s1024 = scalar_lea.vmem [#allocation11], %s1023
        // Predicated region
        $region117: #{tpu_custom_call.1} parent=99 // pred_check
          %p1025 = pneg %p202
        $region118: #{tpu_custom_call.1} parent=99 // pred_check_branch
          %1027 = sbr.rel (%p1025) target = $region120
        $region119: #{tpu_custom_call.1} parent=99 // pred_region
          %1028 = dma.done %s1021, 256
        $region120: #{tpu_custom_call.1} parent=99 // pred_fallthru
          _
        %s1029 = sand.u32 %s65, 1
        %s1030 = scalar_lea.sflag [#allocation13], %s1029
        %s1031 = sand.u32 %s215, 1
        %s1032 = scalar_lea.vmem [#allocation12], %s1031
        // Predicated region
        $region121: #{tpu_custom_call.1} parent=99 // pred_check
          %p1033 = pneg %p228
        $region122: #{tpu_custom_call.1} parent=99 // pred_check_branch
          %1035 = sbr.rel (%p1033) target = $region124
        $region123: #{tpu_custom_call.1} parent=99 // pred_region
          %1036 = dma.done %s1030, 16
        $region124: #{tpu_custom_call.1} parent=99 // pred_fallthru
          _
        %s1037 = sand.u32 %s65, 1
        %s1038 = scalar_lea.sflag [#allocation13], %s1037
        %s1039 = sand.u32 %s241, 1
        %s1040 = smul.addr %s1039, 16
        %s1041 = scalar_lea.vmem [#allocation14], %s1040
        // Predicated region
        $region125: #{tpu_custom_call.1} parent=99 // pred_check
          %p1042 = pneg %p254
        $region126: #{tpu_custom_call.1} parent=99 // pred_check_branch
          %1044 = sbr.rel (%p1042) target = $region128
        $region127: #{tpu_custom_call.1} parent=99 // pred_region
          %1045 = dma.done %s1038, 256
        $region128: #{tpu_custom_call.1} parent=99 // pred_fallthru
          _
        %s1046 = sand.u32 %s65, 1
        %s1047 = scalar_lea.sflag [#allocation16], %s1046
        %s1048 = sand.u32 %s267, 1
        %s1049 = scalar_lea.vmem [#allocation15], %s1048
        // Predicated region
        $region129: #{tpu_custom_call.1} parent=99 // pred_check
          %p1050 = pneg %p280
        $region130: #{tpu_custom_call.1} parent=99 // pred_check_branch
          %1052 = sbr.rel (%p1050) target = $region132
        $region131: #{tpu_custom_call.1} parent=99 // pred_region
          %1053 = dma.done %s1047, 16
        $region132: #{tpu_custom_call.1} parent=99 // pred_fallthru
          _
        %s1054 = sand.u32 %s65, 1
        %s1055 = scalar_lea.sflag [#allocation16], %s1054
        %s1056 = sand.u32 %s293, 1
        %s1057 = smul.addr %s1056, 16
        %s1058 = scalar_lea.vmem [#allocation17], %s1057
        // Predicated region
        $region133: #{tpu_custom_call.1} parent=99 // pred_check
          %p1059 = pneg %p306
        $region134: #{tpu_custom_call.1} parent=99 // pred_check_branch
          %1061 = sbr.rel (%p1059) target = $region136
        $region135: #{tpu_custom_call.1} parent=99 // pred_region
          %1062 = dma.done %s1055, 256
        $region136: #{tpu_custom_call.1} parent=99 // pred_fallthru
          _
        %s1063 = sand.u32 %s65, 1
        %s1064 = scalar_lea.sflag [#allocation19], %s1063
        %s1065 = sand.u32 %s319, 1
        %s1066 = scalar_lea.vmem [#allocation18], %s1065
        // Predicated region
        $region137: #{tpu_custom_call.1} parent=99 // pred_check
          %p1067 = pneg %p332
        $region138: #{tpu_custom_call.1} parent=99 // pred_check_branch
          %1069 = sbr.rel (%p1067) target = $region140
        $region139: #{tpu_custom_call.1} parent=99 // pred_region
          %1070 = dma.done %s1064, 16
        $region140: #{tpu_custom_call.1} parent=99 // pred_fallthru
          _
        %s1071 = sand.u32 %s65, 1
        %s1072 = scalar_lea.sflag [#allocation19], %s1071
        %s1073 = sand.u32 %s345, 1
        %s1074 = smul.addr %s1073, 16
        %s1075 = scalar_lea.vmem [#allocation20], %s1074
        // Predicated region
        $region141: #{tpu_custom_call.1} parent=99 // pred_check
          %p1076 = pneg %p358
        $region142: #{tpu_custom_call.1} parent=99 // pred_check_branch
          %1078 = sbr.rel (%p1076) target = $region144
        $region143: #{tpu_custom_call.1} parent=99 // pred_region
          %1079 = dma.done %s1072, 256
        $region144: #{tpu_custom_call.1} parent=99 // pred_fallthru
          _
        %s1080 = sand.u32 %s65, 1
        %s1081 = scalar_lea.sflag [#allocation22], %s1080
        %s1082 = sand.u32 %s371, 1
        %s1083 = scalar_lea.vmem [#allocation21], %s1082
        // Predicated region
        $region145: #{tpu_custom_call.1} parent=99 // pred_check
          %p1084 = pneg %p384
        $region146: #{tpu_custom_call.1} parent=99 // pred_check_branch
          %1086 = sbr.rel (%p1084) target = $region148
        $region147: #{tpu_custom_call.1} parent=99 // pred_region
          %1087 = dma.done %s1081, 16
        $region148: #{tpu_custom_call.1} parent=99 // pred_fallthru
          _
        %s1088 = sand.u32 %s65, 1
        %s1089 = scalar_lea.sflag [#allocation22], %s1088
        %s1090 = sand.u32 %s397, 1
        %s1091 = scalar_lea.vmem [#allocation23], %s1090
        // Predicated region
        $region149: #{tpu_custom_call.1} parent=99 // pred_check
          %p1092 = pneg %p410
        $region150: #{tpu_custom_call.1} parent=99 // pred_check_branch
          %1094 = sbr.rel (%p1092) target = $region152
        $region151: #{tpu_custom_call.1} parent=99 // pred_region
          %1095 = dma.done %s1089, 16
        $region152: #{tpu_custom_call.1} parent=99 // pred_fallthru
          _
        %s1096 = sand.u32 %s65, 1
        %s1097 = scalar_lea.sflag [#allocation25], %s1096
        %s1098 = sand.u32 %s423, 1
        %s1099 = scalar_lea.vmem [#allocation24], %s1098
        // Predicated region
        $region153: #{tpu_custom_call.1} parent=99 // pred_check
          %p1100 = pneg %p436
        $region154: #{tpu_custom_call.1} parent=99 // pred_check_branch
          %1102 = sbr.rel (%p1100) target = $region156
        $region155: #{tpu_custom_call.1} parent=99 // pred_region
          %1103 = dma.done %s1097, 16
        $region156: #{tpu_custom_call.1} parent=99 // pred_fallthru
          _
        %s1104 = sand.u32 %s65, 1
        %s1105 = scalar_lea.sflag [#allocation25], %s1104
        %s1106 = sand.u32 %s449, 1
        %s1107 = smul.addr %s1106, 16
        %s1108 = scalar_lea.vmem [#allocation26], %s1107
        // Predicated region
        $region157: #{tpu_custom_call.1} parent=99 // pred_check
          %p1109 = pneg %p462
        $region158: #{tpu_custom_call.1} parent=99 // pred_check_branch
          %1111 = sbr.rel (%p1109) target = $region160
        $region159: #{tpu_custom_call.1} parent=99 // pred_region
          %1112 = dma.done %s1105, 256
        $region160: #{tpu_custom_call.1} parent=99 // pred_fallthru
          _
        %s1113 = sand.u32 %s65, 1
        %s1114 = scalar_lea.sflag [#allocation28], %s1113
        %s1115 = sand.u32 %s475, 1
        %s1116 = scalar_lea.vmem [#allocation27], %s1115
        // Predicated region
        $region161: #{tpu_custom_call.1} parent=99 // pred_check
          %p1117 = pneg %p488
        $region162: #{tpu_custom_call.1} parent=99 // pred_check_branch
          %1119 = sbr.rel (%p1117) target = $region164
        $region163: #{tpu_custom_call.1} parent=99 // pred_region
          %1120 = dma.done %s1114, 16
        $region164: #{tpu_custom_call.1} parent=99 // pred_fallthru
          _
        %s1121 = sand.u32 %s65, 1
        %s1122 = scalar_lea.sflag [#allocation28], %s1121
        %s1123 = sand.u32 %s501, 1
        %s1124 = smul.addr %s1123, 32
        %s1125 = scalar_lea.vmem [#allocation29], %s1124
        // Predicated region
        $region165: #{tpu_custom_call.1} parent=99 // pred_check
          %p1126 = pneg %p514
        $region166: #{tpu_custom_call.1} parent=99 // pred_check_branch
          %1128 = sbr.rel (%p1126) target = $region168
        $region167: #{tpu_custom_call.1} parent=99 // pred_region
          %1129 = dma.done %s1122, 512
        $region168: #{tpu_custom_call.1} parent=99 // pred_fallthru
          _
        %s1130 = sand.u32 %s65, 1
        %s1131 = scalar_lea.sflag [#allocation31], %s1130
        %s1132 = sand.u32 %s527, 1
        %s1133 = scalar_lea.vmem [#allocation30], %s1132
        // Predicated region
        $region169: #{tpu_custom_call.1} parent=99 // pred_check
          %p1134 = pneg %p540
        $region170: #{tpu_custom_call.1} parent=99 // pred_check_branch
          %1136 = sbr.rel (%p1134) target = $region172
        $region171: #{tpu_custom_call.1} parent=99 // pred_region
          %1137 = dma.done %s1131, 16
        $region172: #{tpu_custom_call.1} parent=99 // pred_fallthru
          _
        // Predicated region
        $region173: #{tpu_custom_call.1} parent=99 // pred_check
          %p1138 = pneg %p561
        $region174: #{tpu_custom_call.1} parent=99 // pred_check_branch
          %1140 = sbr.rel (%p1138) target = $region176
        $region175: #{tpu_custom_call.1} parent=99 // pred_region
          %1141 = dma.done [#allocation31], 16
        $region176: #{tpu_custom_call.1} parent=99 // pred_fallthru
          _
        // Predicated region
        $region177: #{tpu_custom_call.1} parent=99 // pred_check
          %p1142 = pneg %p582
        $region178: #{tpu_custom_call.1} parent=99 // pred_check_branch
          %1144 = sbr.rel (%p1142) target = $region180
        $region179: #{tpu_custom_call.1} parent=99 // pred_region
          %1145 = dma.done [#allocation34], 16
        $region180: #{tpu_custom_call.1} parent=99 // pred_fallthru
          _
        %s1146 = sand.u32 %s85, 1
        %s1147 = scalar_lea.sflag [#allocation4], %s1146
        %s1148 = sand.u32 %s85, 1
        %s1149 = smul.addr %s1148, 8
        %s1150 = scalar_lea.vmem [#allocation3], %s1149
        %p1151 = pneg %p98
        %p1152 = pneg %p95
        %s1153 = sand.u32 %s65, 1
        %s1154 = scalar_lea.sflag [#allocation7], %s1153
        %s1155 = sand.u32 %s111, 1
        %s1156 = scalar_lea.vmem [#allocation6], %s1155
        %p1157 = pneg %p124
        %p1158 = pneg %p121
        %s1159 = sand.u32 %s65, 1
        %s1160 = scalar_lea.sflag [#allocation7], %s1159
        %s1161 = sand.u32 %s137, 1
        %s1162 = scalar_lea.vmem [#allocation8], %s1161
        %p1163 = pneg %p150
        %p1164 = pneg %p147
        %s1165 = sand.u32 %s65, 1
        %s1166 = scalar_lea.sflag [#allocation10], %s1165
        %s1167 = sand.u32 %s163, 1
        %s1168 = scalar_lea.vmem [#allocation9], %s1167
        %p1169 = pneg %p176
        %p1170 = pneg %p173
        %s1171 = sand.u32 %s65, 1
        %s1172 = scalar_lea.sflag [#allocation10], %s1171
        %s1173 = sand.u32 %s189, 1
        %s1174 = smul.addr %s1173, 16
        %s1175 = scalar_lea.vmem [#allocation11], %s1174
        %p1176 = pneg %p202
        %p1177 = pneg %p199
        %s1178 = sand.u32 %s65, 1
        %s1179 = scalar_lea.sflag [#allocation13], %s1178
        %s1180 = sand.u32 %s215, 1
        %s1181 = scalar_lea.vmem [#allocation12], %s1180
        %p1182 = pneg %p228
        %p1183 = pneg %p225
        %s1184 = sand.u32 %s65, 1
        %s1185 = scalar_lea.sflag [#allocation13], %s1184
        %s1186 = sand.u32 %s241, 1
        %s1187 = smul.addr %s1186, 16
        %s1188 = scalar_lea.vmem [#allocation14], %s1187
        %p1189 = pneg %p254
        %p1190 = pneg %p251
        %s1191 = sand.u32 %s65, 1
        %s1192 = scalar_lea.sflag [#allocation16], %s1191
        %s1193 = sand.u32 %s267, 1
        %s1194 = scalar_lea.vmem [#allocation15], %s1193
        %p1195 = pneg %p280
        %p1196 = pneg %p277
        %s1197 = sand.u32 %s65, 1
        %s1198 = scalar_lea.sflag [#allocation16], %s1197
        %s1199 = sand.u32 %s293, 1
        %s1200 = smul.addr %s1199, 16
        %s1201 = scalar_lea.vmem [#allocation17], %s1200
        %p1202 = pneg %p306
        %p1203 = pneg %p303
        %s1204 = sand.u32 %s65, 1
        %s1205 = scalar_lea.sflag [#allocation19], %s1204
        %s1206 = sand.u32 %s319, 1
        %s1207 = scalar_lea.vmem [#allocation18], %s1206
        %p1208 = pneg %p332
        %p1209 = pneg %p329
        %s1210 = sand.u32 %s65, 1
        %s1211 = scalar_lea.sflag [#allocation19], %s1210
        %s1212 = sand.u32 %s345, 1
        %s1213 = smul.addr %s1212, 16
        %s1214 = scalar_lea.vmem [#allocation20], %s1213
        %p1215 = pneg %p358
        %p1216 = pneg %p355
        %s1217 = sand.u32 %s65, 1
        %s1218 = scalar_lea.sflag [#allocation22], %s1217
        %s1219 = sand.u32 %s371, 1
        %s1220 = scalar_lea.vmem [#allocation21], %s1219
        %p1221 = pneg %p384
        %p1222 = pneg %p381
        %s1223 = sand.u32 %s65, 1
        %s1224 = scalar_lea.sflag [#allocation22], %s1223
        %s1225 = sand.u32 %s397, 1
        %s1226 = scalar_lea.vmem [#allocation23], %s1225
        %p1227 = pneg %p410
        %p1228 = pneg %p407
        %s1229 = sand.u32 %s65, 1
        %s1230 = scalar_lea.sflag [#allocation25], %s1229
        %s1231 = sand.u32 %s423, 1
        %s1232 = scalar_lea.vmem [#allocation24], %s1231
        %p1233 = pneg %p436
        %p1234 = pneg %p433
        %s1235 = sand.u32 %s65, 1
        %s1236 = scalar_lea.sflag [#allocation25], %s1235
        %s1237 = sand.u32 %s449, 1
        %s1238 = smul.addr %s1237, 16
        %s1239 = scalar_lea.vmem [#allocation26], %s1238
        %p1240 = pneg %p462
        %p1241 = pneg %p459
        %s1242 = sand.u32 %s65, 1
        %s1243 = scalar_lea.sflag [#allocation28], %s1242
        %s1244 = sand.u32 %s475, 1
        %s1245 = scalar_lea.vmem [#allocation27], %s1244
        %p1246 = pneg %p488
        %p1247 = pneg %p485
        %s1248 = sand.u32 %s65, 1
        %s1249 = scalar_lea.sflag [#allocation28], %s1248
        %s1250 = sand.u32 %s501, 1
        %s1251 = smul.addr %s1250, 32
        %s1252 = scalar_lea.vmem [#allocation29], %s1251
        %p1253 = pneg %p514
        %p1254 = pneg %p511
        %s1255 = sand.u32 %s65, 1
        %s1256 = scalar_lea.sflag [#allocation31], %s1255
        %s1257 = sand.u32 %s527, 1
        %s1258 = scalar_lea.vmem [#allocation30], %s1257
        %p1259 = pneg %p540
        %p1260 = pneg %p537
        %p1261 = pneg %p561
        %p1262 = pneg %p558
        %p1263 = pneg %p582
        %p1264 = pneg %p579
        %p1265 = pneg %p608
        %p1266 = pneg %p605
        %s1267 = sand.u32 %s595, 1
        %s1268 = scalar_lea.sflag [#allocation5], %s1267
        %s1269 = sand.u32 %s595, 1
        %s1270 = smul.addr %s1269, 8
        %s1271 = scalar_lea.vmem [#allocation35], %s1270
        %p1273 = scmp.eq.s32.totalorder %s70, 0
        // Predicated region
        $region181: #{tpu_custom_call.1} parent=99 // pred_check
          %p1274 = pneg %p1273
        $region182: #{tpu_custom_call.1} parent=99 // pred_check_branch
          %1276 = sbr.rel (%p1274) target = $region184
        $region183: #{tpu_custom_call.1} parent=99 // pred_region
          %v1277 = vld [vmem:[%s991] sm:$0xff]
          %vm1278 = vcmask 261120
          %1279 = vst.msk [vmem:[#allocation2] sm:$0xff] %vm1278, %v1277
        $region184: #{tpu_custom_call.1} parent=99 // pred_fallthru
          _
        %v1280 = vld [vmem:[#allocation2] sm:$0xff]
        %v1281 = vld [vmem:[%s999] sm:$0x1]
        %vm1282 = vcmp.gt.f32.partialorder %v1281, 0.0
        %v1283 = vsel %vm1282, -1e+09, 0.0
        %v1284 = vld [vmem:[%s1007] sm:$0x1]
        %v1285 = vld [vmem:[%s1015] sm:$0x1]
        %vm1286 = vcmask 261120
        %v1287 = vsel %vm1286, %v1280, 0.0
        %1288 = vadd.xlane.f32.xlu0 %v1287
        %v1289 = vpop.xlane.xlu0 %1288
        %v1290 = vrcp.pop 32.0
        %v1291 = vmul.f32 %v1289, %v1290
        %v1292 = vsub.f32 %v1280, %v1291
        %v1293 = vmul.f32 %v1292, %v1292
        %v1294 = vsel %vm1286, %v1293, 0.0
        %1295 = vadd.xlane.f32.xlu0 %v1294
        %v1296 = vpop.xlane.xlu0 %1295
        %v1297 = vmul.f32 %v1296, 0.032258064
        %v1298 = vrsqrt.pop %v1297
        %v1299 = vmul.f32 %v1297, %v1298
        %vm1300 = vcmp.eq.f32.partialorder %v1297, inf
        %v1301 = vsel %vm1300, %v1297, %v1299
        %vm1302 = vcmp.eq.f32.partialorder %v1297, 0.0
        %v1303 = vand.u32 %v1297, 2147483648
        %v1304 = vsel %vm1302, %v1303, %v1301
        %v1305 = vadd.f32 %v1304, 1e-06
        %v1306 = vrcp.pop %v1305
        %v1308 = vlaneseq
        %v1309 = vshrl.u32 %v1308, 7
        %v1310 = vsub.s32 0, %v1309
        %v1311 = vrot.slane %v1284, %v1310
        %v1313 = vmul.f32 %v1311, %v1292
        %v1314 = vmul.f32 %v1313, %v1306
        %v1316 = vlaneseq
        %v1317 = vshrl.u32 %v1316, 7
        %v1318 = vsub.s32 0, %v1317
        %v1319 = vrot.slane %v1285, %v1318
        %v1321 = vadd.f32 %v1314, %v1319
        %v1322 = vpack.c.bf16 %v1321, %v1321
        %v1323 = vld [vmem:[%s1024] sm:$0xf]
        %v1324 = vld [vmem:[%s1024 + $0x4] sm:$0xf]
        %v1325 = vld [vmem:[%s1024 + $0x8] sm:$0xf]
        %v1326 = vld [vmem:[%s1024 + $0xc] sm:$0xf]
        %v1327 = vld [vmem:[%s1032] sm:$0x1]
        %v1329 = vlaneseq
        %v1330 = vshrl.u32 %v1329, 7
        %v1331 = vsub.s32 0, %v1330
        %v1332 = vrot.slane %v1327, %v1331
        %v1338 = vunpack.c.l.b16 %v1323
        %v1339 = vunpack.c.l.b16 %v1324
        %v1340 = vunpack.c.l.b16 %v1325
        %v1341 = vunpack.c.l.b16 %v1326
        %v1342 = vpack.c.b16 %v1339, %v1338
        %v1343 = vpack.c.b16 %v1341, %v1340
        %v1347 = vsel %vm1286, %v1322, 0
        %1349 = vmatprep.subr.bf16.mxu0 0
        %1350 = vmatpush1.bf16.msra.mxu0 %v1342
        %1351 = vmatprep.subr.bf16.mxu0 0
        %1352 = vmatpush1.bf16.msra.mxu0 %v1343
        %1353 = vmatprep.subr.bf16.mxu0 0
        %1354 = vmatpush1.bf16.msra.mxu0 0
        %1355 = vmatprep.subr.bf16.mxu0 0
        %1356 = vmatpush1.bf16.msra.mxu0 0
        %1357 = vmatprep.subr.bf16.mxu0 0
        %1358 = vmatpush1.bf16.msra.mxu0 0
        %1359 = vmatprep.subr.bf16.mxu0 0
        %1360 = vmatpush1.bf16.msra.mxu0 0
        %1361 = vmatprep.subr.bf16.mxu0 0
        %1362 = vmatpush1.bf16.msra.mxu0 0
        %1363 = vmatprep.subr.bf16.mxu0 0
        %1364 = vmatpush1.bf16.msra.mxu0 0
        %1365 = vmatprep.subr.bf16.mxu0 0
        %1366 = vmatpush1.bf16.msra.mxu0 0
        %1367 = vmatprep.subr.bf16.mxu0 0
        %1368 = vmatpush1.bf16.msra.mxu0 0
        %1369 = vmatprep.subr.bf16.mxu0 0
        %1370 = vmatpush1.bf16.msra.mxu0 0
        %1371 = vmatprep.subr.bf16.mxu0 0
        %1372 = vmatpush1.bf16.msra.mxu0 0
        %1373 = vmatprep.subr.bf16.mxu0 0
        %1374 = vmatpush1.bf16.msra.mxu0 0
        %1375 = vmatprep.subr.bf16.mxu0 0
        %1376 = vmatpush1.bf16.msra.mxu0 0
        %1377 = vmatprep.subr.bf16.mxu0 0
        %1378 = vmatpush1.bf16.msra.mxu0 0
        %1379 = vmatprep.subr.bf16.mxu0 0
        %1380 = vmatpush1.bf16.msra.mxu0 0
        %1381 = vmatprep.mubr.bf16.mxu0 0
        %1382 = vmatmul.mubr.bf16.gmra.mrb[0].mxu0 %v1347
        %v1383 = vpop.f32.mrb[0].mxu0
        %v1384 = vadd.f32 %v1332, %v1383
        %v1385 = vpop.f32.mrb[0].mxu0
        %v1386 = vpop.f32.mrb[0].mxu0
        %v1387 = vpop.f32.mrb[0].mxu0
        %1388 = vdwg.mxu0
        %v1389 = vld [vmem:[%s1041] sm:$0xf]
        %v1390 = vld [vmem:[%s1041 + $0x4] sm:$0xf]
        %v1391 = vld [vmem:[%s1041 + $0x8] sm:$0xf]
        %v1392 = vld [vmem:[%s1041 + $0xc] sm:$0xf]
        %v1393 = vld [vmem:[%s1049] sm:$0x1]
        %v1395 = vlaneseq
        %v1396 = vshrl.u32 %v1395, 7
        %v1397 = vsub.s32 0, %v1396
        %v1398 = vrot.slane %v1393, %v1397
        %v1404 = vunpack.c.l.b16 %v1389
        %v1405 = vunpack.c.l.b16 %v1390
        %v1406 = vunpack.c.l.b16 %v1391
        %v1407 = vunpack.c.l.b16 %v1392
        %v1408 = vpack.c.b16 %v1405, %v1404
        %v1409 = vpack.c.b16 %v1407, %v1406
        %1412 = vmatprep.subr.bf16.mxu0 0
        %1413 = vmatpush1.bf16.msra.mxu0 %v1408
        %1414 = vmatprep.subr.bf16.mxu0 0
        %1415 = vmatpush1.bf16.msra.mxu0 %v1409
        %1416 = vmatprep.subr.bf16.mxu0 0
        %1417 = vmatpush1.bf16.msra.mxu0 0
        %1418 = vmatprep.subr.bf16.mxu0 0
        %1419 = vmatpush1.bf16.msra.mxu0 0
        %1420 = vmatprep.subr.bf16.mxu0 0
        %1421 = vmatpush1.bf16.msra.mxu0 0
        %1422 = vmatprep.subr.bf16.mxu0 0
        %1423 = vmatpush1.bf16.msra.mxu0 0
        %1424 = vmatprep.subr.bf16.mxu0 0
        %1425 = vmatpush1.bf16.msra.mxu0 0
        %1426 = vmatprep.subr.bf16.mxu0 0
        %1427 = vmatpush1.bf16.msra.mxu0 0
        %1428 = vmatprep.subr.bf16.mxu0 0
        %1429 = vmatpush1.bf16.msra.mxu0 0
        %1430 = vmatprep.subr.bf16.mxu0 0
        %1431 = vmatpush1.bf16.msra.mxu0 0
        %1432 = vmatprep.subr.bf16.mxu0 0
        %1433 = vmatpush1.bf16.msra.mxu0 0
        %1434 = vmatprep.subr.bf16.mxu0 0
        %1435 = vmatpush1.bf16.msra.mxu0 0
        %1436 = vmatprep.subr.bf16.mxu0 0
        %1437 = vmatpush1.bf16.msra.mxu0 0
        %1438 = vmatprep.subr.bf16.mxu0 0
        %1439 = vmatpush1.bf16.msra.mxu0 0
        %1440 = vmatprep.subr.bf16.mxu0 0
        %1441 = vmatpush1.bf16.msra.mxu0 0
        %1442 = vmatprep.subr.bf16.mxu0 0
        %1443 = vmatpush1.bf16.msra.mxu0 0
        %1444 = vmatprep.mubr.bf16.mxu0 0
        %1445 = vmatmul.mubr.bf16.gmra.mrb[0].mxu0 %v1347
        %v1446 = vpop.f32.mrb[0].mxu0
        %v1447 = vadd.f32 %v1398, %v1446
        %v1448 = vpop.f32.mrb[0].mxu0
        %v1449 = vpop.f32.mrb[0].mxu0
        %v1450 = vpop.f32.mrb[0].mxu0
        %1451 = vdwg.mxu0
        %v1452 = vld [vmem:[%s1058] sm:$0xf]
        %v1453 = vld [vmem:[%s1058 + $0x4] sm:$0xf]
        %v1454 = vld [vmem:[%s1058 + $0x8] sm:$0xf]
        %v1455 = vld [vmem:[%s1058 + $0xc] sm:$0xf]
        %v1456 = vld [vmem:[%s1066] sm:$0x1]
        %v1458 = vlaneseq
        %v1459 = vshrl.u32 %v1458, 7
        %v1460 = vsub.s32 0, %v1459
        %v1461 = vrot.slane %v1456, %v1460
        %v1467 = vunpack.c.l.b16 %v1452
        %v1468 = vunpack.c.l.b16 %v1453
        %v1469 = vunpack.c.l.b16 %v1454
        %v1470 = vunpack.c.l.b16 %v1455
        %v1471 = vpack.c.b16 %v1468, %v1467
        %v1472 = vpack.c.b16 %v1470, %v1469
        %1475 = vmatprep.subr.bf16.mxu0 0
        %1476 = vmatpush1.bf16.msra.mxu0 %v1471
        %1477 = vmatprep.subr.bf16.mxu0 0
        %1478 = vmatpush1.bf16.msra.mxu0 %v1472
        %1479 = vmatprep.subr.bf16.mxu0 0
        %1480 = vmatpush1.bf16.msra.mxu0 0
        %1481 = vmatprep.subr.bf16.mxu0 0
        %1482 = vmatpush1.bf16.msra.mxu0 0
        %1483 = vmatprep.subr.bf16.mxu0 0
        %1484 = vmatpush1.bf16.msra.mxu0 0
        %1485 = vmatprep.subr.bf16.mxu0 0
        %1486 = vmatpush1.bf16.msra.mxu0 0
        %1487 = vmatprep.subr.bf16.mxu0 0
        %1488 = vmatpush1.bf16.msra.mxu0 0
        %1489 = vmatprep.subr.bf16.mxu0 0
        %1490 = vmatpush1.bf16.msra.mxu0 0
        %1491 = vmatprep.subr.bf16.mxu0 0
        %1492 = vmatpush1.bf16.msra.mxu0 0
        %1493 = vmatprep.subr.bf16.mxu0 0
        %1494 = vmatpush1.bf16.msra.mxu0 0
        %1495 = vmatprep.subr.bf16.mxu0 0
        %1496 = vmatpush1.bf16.msra.mxu0 0
        %1497 = vmatprep.subr.bf16.mxu0 0
        %1498 = vmatpush1.bf16.msra.mxu0 0
        %1499 = vmatprep.subr.bf16.mxu0 0
        %1500 = vmatpush1.bf16.msra.mxu0 0
        %1501 = vmatprep.subr.bf16.mxu0 0
        %1502 = vmatpush1.bf16.msra.mxu0 0
        %1503 = vmatprep.subr.bf16.mxu0 0
        %1504 = vmatpush1.bf16.msra.mxu0 0
        %1505 = vmatprep.subr.bf16.mxu0 0
        %1506 = vmatpush1.bf16.msra.mxu0 0
        %1507 = vmatprep.mubr.bf16.mxu0 0
        %1508 = vmatmul.mubr.bf16.gmra.mrb[0].mxu0 %v1347
        %v1509 = vpop.f32.mrb[0].mxu0
        %v1510 = vadd.f32 %v1461, %v1509
        %v1511 = vpop.f32.mrb[0].mxu0
        %v1512 = vpop.f32.mrb[0].mxu0
        %v1513 = vpop.f32.mrb[0].mxu0
        %1514 = vdwg.mxu0
        %v1515 = vmul.f32 %v1384, 0.35355338
        %1517 = vrot.lane.b32.xlu0 %v1515, 120
        %v1518 = vpop.permute.xlu0 %1517
        %1520 = vrot.lane.b32.xlu0 %v1515, 112
        %v1521 = vpop.permute.xlu0 %1520
        %1523 = vrot.lane.b32.xlu0 %v1515, 104
        %v1524 = vpop.permute.xlu0 %1523
        %v1526 = vpack.c.bf16 %v1515, %v1515
        %v1527 = vpack.c.bf16 %v1518, %v1518
        %v1528 = vpack.c.bf16 %v1521, %v1521
        %v1529 = vpack.c.bf16 %v1524, %v1524
        %1531 = vrot.lane.b32.xlu0 %v1447, 120
        %v1532 = vpop.permute.xlu0 %1531
        %1534 = vrot.lane.b32.xlu0 %v1447, 112
        %v1535 = vpop.permute.xlu0 %1534
        %1537 = vrot.lane.b32.xlu0 %v1447, 104
        %v1538 = vpop.permute.xlu0 %1537
        %v1540 = vpack.c.bf16 %v1447, %v1447
        %v1541 = vpack.c.bf16 %v1532, %v1532
        %v1542 = vpack.c.bf16 %v1535, %v1535
        %v1543 = vpack.c.bf16 %v1538, %v1538
        %1545 = vrot.lane.b32.xlu0 %v1510, 120
        %v1546 = vpop.permute.xlu0 %1545
        %1548 = vrot.lane.b32.xlu0 %v1510, 112
        %v1549 = vpop.permute.xlu0 %1548
        %1551 = vrot.lane.b32.xlu0 %v1510, 104
        %v1552 = vpop.permute.xlu0 %1551
        %v1554 = vpack.c.bf16 %v1510, %v1510
        %v1555 = vpack.c.bf16 %v1546, %v1546
        %v1556 = vpack.c.bf16 %v1549, %v1549
        %v1557 = vpack.c.bf16 %v1552, %v1552
        %v1559 = vlaneseq
        %v1560 = vshrl.u32 %v1559, 7
        %v1561 = vsub.s32 0, %v1560
        %v1562 = vrot.slane %v1283, %v1561
        %vm1564 = vcmask 64512
        %v1566 = vsel %vm1564, %v1526, 0
        %v1569 = vsel %vm1564, %v1540, 0
        %1571 = vmatprep.subr.bf16.mxu0 0
        %1572 = vmatpush1.bf16.xpose.msra.mxu0 %v1569
        %1573 = vmatprep.subr.bf16.mxu0 0
        %1574 = vmatpush1.bf16.xpose.msra.mxu0 0
        %1575 = vmatprep.subr.bf16.mxu0 0
        %1576 = vmatpush1.bf16.xpose.msra.mxu0 0
        %1577 = vmatprep.subr.bf16.mxu0 0
        %1578 = vmatpush1.bf16.xpose.msra.mxu0 0
        %1579 = vmatprep.subr.bf16.mxu0 0
        %1580 = vmatpush1.bf16.xpose.msra.mxu0 0
        %1581 = vmatprep.subr.bf16.mxu0 0
        %1582 = vmatpush1.bf16.xpose.msra.mxu0 0
        %1583 = vmatprep.subr.bf16.mxu0 0
        %1584 = vmatpush1.bf16.xpose.msra.mxu0 0
        %1585 = vmatprep.subr.bf16.mxu0 0
        %1586 = vmatpush1.bf16.xpose.msra.mxu0 0
        %1587 = vmatprep.subr.bf16.mxu0 0
        %1588 = vmatpush1.bf16.xpose.msra.mxu0 0
        %1589 = vmatprep.subr.bf16.mxu0 0
        %1590 = vmatpush1.bf16.xpose.msra.mxu0 0
        %1591 = vmatprep.subr.bf16.mxu0 0
        %1592 = vmatpush1.bf16.xpose.msra.mxu0 0
        %1593 = vmatprep.subr.bf16.mxu0 0
        %1594 = vmatpush1.bf16.xpose.msra.mxu0 0
        %1595 = vmatprep.subr.bf16.mxu0 0
        %1596 = vmatpush1.bf16.xpose.msra.mxu0 0
        %1597 = vmatprep.subr.bf16.mxu0 0
        %1598 = vmatpush1.bf16.xpose.msra.mxu0 0
        %1599 = vmatprep.subr.bf16.mxu0 0
        %1600 = vmatpush1.bf16.xpose.msra.mxu0 0
        %1601 = vmatprep.subr.bf16.mxu0 0
        %1602 = vmatpush1.bf16.xpose.msra.mxu0 0
        %1603 = vmatprep.mubr.bf16.mxu0 0
        %1604 = vmatmul.mubr.bf16.gmra.mrb[0].mxu0 %v1566
        %v1605 = vpop.f32.mrb[0].mxu0
        %v1606 = vadd.f32 %v1562, %v1605
        %v1607 = vpop.f32.mrb[0].mxu0
        %v1608 = vpop.f32.mrb[0].mxu0
        %v1609 = vpop.f32.mrb[0].mxu0
        %1610 = vdwg.mxu0
        %v1612 = vsel %vm1564, %v1527, 0
        %v1615 = vsel %vm1564, %v1541, 0
        %1617 = vmatprep.subr.bf16.mxu0 0
        %1618 = vmatpush1.bf16.xpose.msra.mxu0 %v1615
        %1619 = vmatprep.subr.bf16.mxu0 0
        %1620 = vmatpush1.bf16.xpose.msra.mxu0 0
        %1621 = vmatprep.subr.bf16.mxu0 0
        %1622 = vmatpush1.bf16.xpose.msra.mxu0 0
        %1623 = vmatprep.subr.bf16.mxu0 0
        %1624 = vmatpush1.bf16.xpose.msra.mxu0 0
        %1625 = vmatprep.subr.bf16.mxu0 0
        %1626 = vmatpush1.bf16.xpose.msra.mxu0 0
        %1627 = vmatprep.subr.bf16.mxu0 0
        %1628 = vmatpush1.bf16.xpose.msra.mxu0 0
        %1629 = vmatprep.subr.bf16.mxu0 0
        %1630 = vmatpush1.bf16.xpose.msra.mxu0 0
        %1631 = vmatprep.subr.bf16.mxu0 0
        %1632 = vmatpush1.bf16.xpose.msra.mxu0 0
        %1633 = vmatprep.subr.bf16.mxu0 0
        %1634 = vmatpush1.bf16.xpose.msra.mxu0 0
        %1635 = vmatprep.subr.bf16.mxu0 0
        %1636 = vmatpush1.bf16.xpose.msra.mxu0 0
        %1637 = vmatprep.subr.bf16.mxu0 0
        %1638 = vmatpush1.bf16.xpose.msra.mxu0 0
        %1639 = vmatprep.subr.bf16.mxu0 0
        %1640 = vmatpush1.bf16.xpose.msra.mxu0 0
        %1641 = vmatprep.subr.bf16.mxu0 0
        %1642 = vmatpush1.bf16.xpose.msra.mxu0 0
        %1643 = vmatprep.subr.bf16.mxu0 0
        %1644 = vmatpush1.bf16.xpose.msra.mxu0 0
        %1645 = vmatprep.subr.bf16.mxu0 0
        %1646 = vmatpush1.bf16.xpose.msra.mxu0 0
        %1647 = vmatprep.subr.bf16.mxu0 0
        %1648 = vmatpush1.bf16.xpose.msra.mxu0 0
        %1649 = vmatprep.mubr.bf16.mxu0 0
        %1650 = vmatmul.mubr.bf16.gmra.mrb[0].mxu0 %v1612
        %v1651 = vpop.f32.mrb[0].mxu0
        %v1652 = vadd.f32 %v1562, %v1651
        %v1653 = vpop.f32.mrb[0].mxu0
        %v1654 = vpop.f32.mrb[0].mxu0
        %v1655 = vpop.f32.mrb[0].mxu0
        %1656 = vdwg.mxu0
        %v1658 = vsel %vm1564, %v1528, 0
        %v1661 = vsel %vm1564, %v1542, 0
        %1663 = vmatprep.subr.bf16.mxu0 0
        %1664 = vmatpush1.bf16.xpose.msra.mxu0 %v1661
        %1665 = vmatprep.subr.bf16.mxu0 0
        %1666 = vmatpush1.bf16.xpose.msra.mxu0 0
        %1667 = vmatprep.subr.bf16.mxu0 0
        %1668 = vmatpush1.bf16.xpose.msra.mxu0 0
        %1669 = vmatprep.subr.bf16.mxu0 0
        %1670 = vmatpush1.bf16.xpose.msra.mxu0 0
        %1671 = vmatprep.subr.bf16.mxu0 0
        %1672 = vmatpush1.bf16.xpose.msra.mxu0 0
        %1673 = vmatprep.subr.bf16.mxu0 0
        %1674 = vmatpush1.bf16.xpose.msra.mxu0 0
        %1675 = vmatprep.subr.bf16.mxu0 0
        %1676 = vmatpush1.bf16.xpose.msra.mxu0 0
        %1677 = vmatprep.subr.bf16.mxu0 0
        %1678 = vmatpush1.bf16.xpose.msra.mxu0 0
        %1679 = vmatprep.subr.bf16.mxu0 0
        %1680 = vmatpush1.bf16.xpose.msra.mxu0 0
        %1681 = vmatprep.subr.bf16.mxu0 0
        %1682 = vmatpush1.bf16.xpose.msra.mxu0 0
        %1683 = vmatprep.subr.bf16.mxu0 0
        %1684 = vmatpush1.bf16.xpose.msra.mxu0 0
        %1685 = vmatprep.subr.bf16.mxu0 0
        %1686 = vmatpush1.bf16.xpose.msra.mxu0 0
        %1687 = vmatprep.subr.bf16.mxu0 0
        %1688 = vmatpush1.bf16.xpose.msra.mxu0 0
        %1689 = vmatprep.subr.bf16.mxu0 0
        %1690 = vmatpush1.bf16.xpose.msra.mxu0 0
        %1691 = vmatprep.subr.bf16.mxu0 0
        %1692 = vmatpush1.bf16.xpose.msra.mxu0 0
        %1693 = vmatprep.subr.bf16.mxu0 0
        %1694 = vmatpush1.bf16.xpose.msra.mxu0 0
        %1695 = vmatprep.mubr.bf16.mxu0 0
        %1696 = vmatmul.mubr.bf16.gmra.mrb[0].mxu0 %v1658
        %v1697 = vpop.f32.mrb[0].mxu0
        %v1698 = vadd.f32 %v1562, %v1697
        %v1699 = vpop.f32.mrb[0].mxu0
        %v1700 = vpop.f32.mrb[0].mxu0
        %v1701 = vpop.f32.mrb[0].mxu0
        %1702 = vdwg.mxu0
        %v1704 = vsel %vm1564, %v1529, 0
        %v1707 = vsel %vm1564, %v1543, 0
        %1709 = vmatprep.subr.bf16.mxu0 0
        %1710 = vmatpush1.bf16.xpose.msra.mxu0 %v1707
        %1711 = vmatprep.subr.bf16.mxu0 0
        %1712 = vmatpush1.bf16.xpose.msra.mxu0 0
        %1713 = vmatprep.subr.bf16.mxu0 0
        %1714 = vmatpush1.bf16.xpose.msra.mxu0 0
        %1715 = vmatprep.subr.bf16.mxu0 0
        %1716 = vmatpush1.bf16.xpose.msra.mxu0 0
        %1717 = vmatprep.subr.bf16.mxu0 0
        %1718 = vmatpush1.bf16.xpose.msra.mxu0 0
        %1719 = vmatprep.subr.bf16.mxu0 0
        %1720 = vmatpush1.bf16.xpose.msra.mxu0 0
        %1721 = vmatprep.subr.bf16.mxu0 0
        %1722 = vmatpush1.bf16.xpose.msra.mxu0 0
        %1723 = vmatprep.subr.bf16.mxu0 0
        %1724 = vmatpush1.bf16.xpose.msra.mxu0 0
        %1725 = vmatprep.subr.bf16.mxu0 0
        %1726 = vmatpush1.bf16.xpose.msra.mxu0 0
        %1727 = vmatprep.subr.bf16.mxu0 0
        %1728 = vmatpush1.bf16.xpose.msra.mxu0 0
        %1729 = vmatprep.subr.bf16.mxu0 0
        %1730 = vmatpush1.bf16.xpose.msra.mxu0 0
        %1731 = vmatprep.subr.bf16.mxu0 0
        %1732 = vmatpush1.bf16.xpose.msra.mxu0 0
        %1733 = vmatprep.subr.bf16.mxu0 0
        %1734 = vmatpush1.bf16.xpose.msra.mxu0 0
        %1735 = vmatprep.subr.bf16.mxu0 0
        %1736 = vmatpush1.bf16.xpose.msra.mxu0 0
        %1737 = vmatprep.subr.bf16.mxu0 0
        %1738 = vmatpush1.bf16.xpose.msra.mxu0 0
        %1739 = vmatprep.subr.bf16.mxu0 0
        %1740 = vmatpush1.bf16.xpose.msra.mxu0 0
        %1741 = vmatprep.mubr.bf16.mxu0 0
        %1742 = vmatmul.mubr.bf16.gmra.mrb[0].mxu0 %v1704
        %v1743 = vpop.f32.mrb[0].mxu0
        %v1744 = vadd.f32 %v1562, %v1743
        %v1745 = vpop.f32.mrb[0].mxu0
        %v1746 = vpop.f32.mrb[0].mxu0
        %v1747 = vpop.f32.mrb[0].mxu0
        %1748 = vdwg.mxu0
        %v1749 = vsel %vm1564, %v1606, -inf
        %1750 = vmax.xlane.f32.xlu0 %v1749
        %v1751 = vpop.xlane.xlu0 %1750
        %v1752 = vsel %vm1564, %v1652, -inf
        %1753 = vmax.xlane.f32.xlu0 %v1752
        %v1754 = vpop.xlane.xlu0 %1753
        %v1755 = vsel %vm1564, %v1698, -inf
        %1756 = vmax.xlane.f32.xlu0 %v1755
        %v1757 = vpop.xlane.xlu0 %1756
        %v1758 = vsel %vm1564, %v1744, -inf
        %1759 = vmax.xlane.f32.xlu0 %v1758
        %v1760 = vpop.xlane.xlu0 %1759
        %v1761 = vsub.f32 %v1606, %v1751
        %v1762 = vsub.f32 %v1652, %v1754
        %v1763 = vsub.f32 %v1698, %v1757
        %v1764 = vsub.f32 %v1744, %v1760
        %v1765 = vmul.f32 %v1761, 1.442695
        %v1766 = vpow.pop %v1765
        %v1767 = vmul.f32 %v1762, 1.442695
        %v1768 = vpow.pop %v1767
        %v1769 = vmul.f32 %v1763, 1.442695
        %v1770 = vpow.pop %v1769
        %v1771 = vmul.f32 %v1764, 1.442695
        %v1772 = vpow.pop %v1771
        %v1773 = vsel %vm1564, %v1766, 0.0
        %1774 = vadd.xlane.f32.xlu0 %v1773
        %v1775 = vpop.xlane.xlu0 %1774
        %v1776 = vsel %vm1564, %v1768, 0.0
        %1777 = vadd.xlane.f32.xlu0 %v1776
        %v1778 = vpop.xlane.xlu0 %1777
        %v1779 = vsel %vm1564, %v1770, 0.0
        %1780 = vadd.xlane.f32.xlu0 %v1779
        %v1781 = vpop.xlane.xlu0 %1780
        %v1782 = vsel %vm1564, %v1772, 0.0
        %1783 = vadd.xlane.f32.xlu0 %v1782
        %v1784 = vpop.xlane.xlu0 %1783
        %v1785 = vrcp.pop %v1775
        %v1786 = vrcp.pop %v1778
        %v1787 = vrcp.pop %v1781
        %v1788 = vrcp.pop %v1784
        %v1789 = vmul.f32 %v1766, %v1785
        %v1790 = vmul.f32 %v1768, %v1786
        %v1791 = vmul.f32 %v1770, %v1787
        %v1792 = vmul.f32 %v1772, %v1788
        %v1793 = vpack.c.bf16 %v1789, %v1789
        %v1794 = vpack.c.bf16 %v1790, %v1790
        %v1795 = vpack.c.bf16 %v1791, %v1791
        %v1796 = vpack.c.bf16 %v1792, %v1792
        %v1798 = vsel %vm1564, %v1793, 0
        %vm1800 = vcmask 1043456
        %v1802 = vsel %vm1800, %v1554, 0
        %1804 = vmatprep.subr.bf16.mxu0 0
        %1805 = vmatpush1.bf16.msra.mxu0 %v1802
        %1806 = vmatprep.subr.bf16.mxu0 0
        %1807 = vmatpush1.bf16.msra.mxu0 0
        %1808 = vmatprep.subr.bf16.mxu0 0
        %1809 = vmatpush1.bf16.msra.mxu0 0
        %1810 = vmatprep.subr.bf16.mxu0 0
        %1811 = vmatpush1.bf16.msra.mxu0 0
        %1812 = vmatprep.subr.bf16.mxu0 0
        %1813 = vmatpush1.bf16.msra.mxu0 0
        %1814 = vmatprep.subr.bf16.mxu0 0
        %1815 = vmatpush1.bf16.msra.mxu0 0
        %1816 = vmatprep.subr.bf16.mxu0 0
        %1817 = vmatpush1.bf16.msra.mxu0 0
        %1818 = vmatprep.subr.bf16.mxu0 0
        %1819 = vmatpush1.bf16.msra.mxu0 0
        %1820 = vmatprep.subr.bf16.mxu0 0
        %1821 = vmatpush1.bf16.msra.mxu0 0
        %1822 = vmatprep.subr.bf16.mxu0 0
        %1823 = vmatpush1.bf16.msra.mxu0 0
        %1824 = vmatprep.subr.bf16.mxu0 0
        %1825 = vmatpush1.bf16.msra.mxu0 0
        %1826 = vmatprep.subr.bf16.mxu0 0
        %1827 = vmatpush1.bf16.msra.mxu0 0
        %1828 = vmatprep.subr.bf16.mxu0 0
        %1829 = vmatpush1.bf16.msra.mxu0 0
        %1830 = vmatprep.subr.bf16.mxu0 0
        %1831 = vmatpush1.bf16.msra.mxu0 0
        %1832 = vmatprep.subr.bf16.mxu0 0
        %1833 = vmatpush1.bf16.msra.mxu0 0
        %1834 = vmatprep.subr.bf16.mxu0 0
        %1835 = vmatpush1.bf16.msra.mxu0 0
        %1836 = vmatprep.mubr.bf16.mxu0 0
        %1837 = vmatmul.mubr.bf16.gmra.mrb[0].mxu0 %v1798
        %v1838 = vpop.f32.mrb[0].mxu0
        %v1839 = vadd.f32 0.0, %v1838
        %v1840 = vpop.f32.mrb[0].mxu0
        %v1841 = vpop.f32.mrb[0].mxu0
        %v1842 = vpop.f32.mrb[0].mxu0
        %1843 = vdwg.mxu0
        %v1845 = vsel %vm1564, %v1794, 0
        %v1848 = vsel %vm1800, %v1555, 0
        %1850 = vmatprep.subr.bf16.mxu0 0
        %1851 = vmatpush1.bf16.msra.mxu0 %v1848
        %1852 = vmatprep.subr.bf16.mxu0 0
        %1853 = vmatpush1.bf16.msra.mxu0 0
        %1854 = vmatprep.subr.bf16.mxu0 0
        %1855 = vmatpush1.bf16.msra.mxu0 0
        %1856 = vmatprep.subr.bf16.mxu0 0
        %1857 = vmatpush1.bf16.msra.mxu0 0
        %1858 = vmatprep.subr.bf16.mxu0 0
        %1859 = vmatpush1.bf16.msra.mxu0 0
        %1860 = vmatprep.subr.bf16.mxu0 0
        %1861 = vmatpush1.bf16.msra.mxu0 0
        %1862 = vmatprep.subr.bf16.mxu0 0
        %1863 = vmatpush1.bf16.msra.mxu0 0
        %1864 = vmatprep.subr.bf16.mxu0 0
        %1865 = vmatpush1.bf16.msra.mxu0 0
        %1866 = vmatprep.subr.bf16.mxu0 0
        %1867 = vmatpush1.bf16.msra.mxu0 0
        %1868 = vmatprep.subr.bf16.mxu0 0
        %1869 = vmatpush1.bf16.msra.mxu0 0
        %1870 = vmatprep.subr.bf16.mxu0 0
        %1871 = vmatpush1.bf16.msra.mxu0 0
        %1872 = vmatprep.subr.bf16.mxu0 0
        %1873 = vmatpush1.bf16.msra.mxu0 0
        %1874 = vmatprep.subr.bf16.mxu0 0
        %1875 = vmatpush1.bf16.msra.mxu0 0
        %1876 = vmatprep.subr.bf16.mxu0 0
        %1877 = vmatpush1.bf16.msra.mxu0 0
        %1878 = vmatprep.subr.bf16.mxu0 0
        %1879 = vmatpush1.bf16.msra.mxu0 0
        %1880 = vmatprep.subr.bf16.mxu0 0
        %1881 = vmatpush1.bf16.msra.mxu0 0
        %1882 = vmatprep.mubr.bf16.mxu0 0
        %1883 = vmatmul.mubr.bf16.gmra.mrb[0].mxu0 %v1845
        %v1884 = vpop.f32.mrb[0].mxu0
        %v1885 = vadd.f32 0.0, %v1884
        %v1886 = vpop.f32.mrb[0].mxu0
        %v1887 = vpop.f32.mrb[0].mxu0
        %v1888 = vpop.f32.mrb[0].mxu0
        %1889 = vdwg.mxu0
        %v1891 = vsel %vm1564, %v1795, 0
        %v1894 = vsel %vm1800, %v1556, 0
        %1896 = vmatprep.subr.bf16.mxu0 0
        %1897 = vmatpush1.bf16.msra.mxu0 %v1894
        %1898 = vmatprep.subr.bf16.mxu0 0
        %1899 = vmatpush1.bf16.msra.mxu0 0
        %1900 = vmatprep.subr.bf16.mxu0 0
        %1901 = vmatpush1.bf16.msra.mxu0 0
        %1902 = vmatprep.subr.bf16.mxu0 0
        %1903 = vmatpush1.bf16.msra.mxu0 0
        %1904 = vmatprep.subr.bf16.mxu0 0
        %1905 = vmatpush1.bf16.msra.mxu0 0
        %1906 = vmatprep.subr.bf16.mxu0 0
        %1907 = vmatpush1.bf16.msra.mxu0 0
        %1908 = vmatprep.subr.bf16.mxu0 0
        %1909 = vmatpush1.bf16.msra.mxu0 0
        %1910 = vmatprep.subr.bf16.mxu0 0
        %1911 = vmatpush1.bf16.msra.mxu0 0
        %1912 = vmatprep.subr.bf16.mxu0 0
        %1913 = vmatpush1.bf16.msra.mxu0 0
        %1914 = vmatprep.subr.bf16.mxu0 0
        %1915 = vmatpush1.bf16.msra.mxu0 0
        %1916 = vmatprep.subr.bf16.mxu0 0
        %1917 = vmatpush1.bf16.msra.mxu0 0
        %1918 = vmatprep.subr.bf16.mxu0 0
        %1919 = vmatpush1.bf16.msra.mxu0 0
        %1920 = vmatprep.subr.bf16.mxu0 0
        %1921 = vmatpush1.bf16.msra.mxu0 0
        %1922 = vmatprep.subr.bf16.mxu0 0
        %1923 = vmatpush1.bf16.msra.mxu0 0
        %1924 = vmatprep.subr.bf16.mxu0 0
        %1925 = vmatpush1.bf16.msra.mxu0 0
        %1926 = vmatprep.subr.bf16.mxu0 0
        %1927 = vmatpush1.bf16.msra.mxu0 0
        %1928 = vmatprep.mubr.bf16.mxu0 0
        %1929 = vmatmul.mubr.bf16.gmra.mrb[0].mxu0 %v1891
        %v1930 = vpop.f32.mrb[0].mxu0
        %v1931 = vadd.f32 0.0, %v1930
        %v1932 = vpop.f32.mrb[0].mxu0
        %v1933 = vpop.f32.mrb[0].mxu0
        %v1934 = vpop.f32.mrb[0].mxu0
        %1935 = vdwg.mxu0
        %v1937 = vsel %vm1564, %v1796, 0
        %v1940 = vsel %vm1800, %v1557, 0
        %1942 = vmatprep.subr.bf16.mxu0 0
        %1943 = vmatpush1.bf16.msra.mxu0 %v1940
        %1944 = vmatprep.subr.bf16.mxu0 0
        %1945 = vmatpush1.bf16.msra.mxu0 0
        %1946 = vmatprep.subr.bf16.mxu0 0
        %1947 = vmatpush1.bf16.msra.mxu0 0
        %1948 = vmatprep.subr.bf16.mxu0 0
        %1949 = vmatpush1.bf16.msra.mxu0 0
        %1950 = vmatprep.subr.bf16.mxu0 0
        %1951 = vmatpush1.bf16.msra.mxu0 0
        %1952 = vmatprep.subr.bf16.mxu0 0
        %1953 = vmatpush1.bf16.msra.mxu0 0
        %1954 = vmatprep.subr.bf16.mxu0 0
        %1955 = vmatpush1.bf16.msra.mxu0 0
        %1956 = vmatprep.subr.bf16.mxu0 0
        %1957 = vmatpush1.bf16.msra.mxu0 0
        %1958 = vmatprep.subr.bf16.mxu0 0
        %1959 = vmatpush1.bf16.msra.mxu0 0
        %1960 = vmatprep.subr.bf16.mxu0 0
        %1961 = vmatpush1.bf16.msra.mxu0 0
        %1962 = vmatprep.subr.bf16.mxu0 0
        %1963 = vmatpush1.bf16.msra.mxu0 0
        %1964 = vmatprep.subr.bf16.mxu0 0
        %1965 = vmatpush1.bf16.msra.mxu0 0
        %1966 = vmatprep.subr.bf16.mxu0 0
        %1967 = vmatpush1.bf16.msra.mxu0 0
        %1968 = vmatprep.subr.bf16.mxu0 0
        %1969 = vmatpush1.bf16.msra.mxu0 0
        %1970 = vmatprep.subr.bf16.mxu0 0
        %1971 = vmatpush1.bf16.msra.mxu0 0
        %1972 = vmatprep.subr.bf16.mxu0 0
        %1973 = vmatpush1.bf16.msra.mxu0 0
        %1974 = vmatprep.mubr.bf16.mxu0 0
        %1975 = vmatmul.mubr.bf16.gmra.mrb[0].mxu0 %v1937
        %v1976 = vpop.f32.mrb[0].mxu0
        %v1977 = vadd.f32 0.0, %v1976
        %v1978 = vpop.f32.mrb[0].mxu0
        %v1979 = vpop.f32.mrb[0].mxu0
        %v1980 = vpop.f32.mrb[0].mxu0
        %1981 = vdwg.mxu0
        %1983 = vrot.lane.b32.xlu0 %v1885, 8
        %v1984 = vpop.permute.xlu0 %1983
        %1987 = vrot.lane.b32.xlu0 %v1931, 16
        %v1988 = vpop.permute.xlu0 %1987
        %1991 = vrot.lane.b32.xlu0 %v1977, 24
        %v1992 = vpop.permute.xlu0 %1991
        %v1994 = vsel %vm1564, %v1839, %v1984
        %vm1995 = vcmask 130048
        %v1996 = vsel %vm1995, %v1994, %v1988
        %vm1997 = vcmask 195584
        %v1998 = vsel %vm1997, %v1996, %v1992
        %v1999 = vpack.c.bf16 %v1998, %v1998
        %v2000 = vld [vmem:[%s1075] sm:$0xf]
        %v2001 = vld [vmem:[%s1075 + $0x4] sm:$0xf]
        %v2002 = vld [vmem:[%s1075 + $0x8] sm:$0xf]
        %v2003 = vld [vmem:[%s1075 + $0xc] sm:$0xf]
        %v2004 = vld [vmem:[%s1083] sm:$0x1]
        %v2006 = vlaneseq
        %v2007 = vshrl.u32 %v2006, 7
        %v2008 = vsub.s32 0, %v2007
        %v2009 = vrot.slane %v2004, %v2008
        %v2015 = vunpack.c.l.b16 %v2000
        %v2016 = vunpack.c.l.b16 %v2001
        %v2017 = vunpack.c.l.b16 %v2002
        %v2018 = vunpack.c.l.b16 %v2003
        %v2019 = vpack.c.b16 %v2016, %v2015
        %v2020 = vpack.c.b16 %v2018, %v2017
        %v2024 = vsel %vm1286, %v1999, 0
        %2026 = vmatprep.subr.bf16.mxu0 0
        %2027 = vmatpush1.bf16.msra.mxu0 %v2019
        %2028 = vmatprep.subr.bf16.mxu0 0
        %2029 = vmatpush1.bf16.msra.mxu0 %v2020
        %2030 = vmatprep.subr.bf16.mxu0 0
        %2031 = vmatpush1.bf16.msra.mxu0 0
        %2032 = vmatprep.subr.bf16.mxu0 0
        %2033 = vmatpush1.bf16.msra.mxu0 0
        %2034 = vmatprep.subr.bf16.mxu0 0
        %2035 = vmatpush1.bf16.msra.mxu0 0
        %2036 = vmatprep.subr.bf16.mxu0 0
        %2037 = vmatpush1.bf16.msra.mxu0 0
        %2038 = vmatprep.subr.bf16.mxu0 0
        %2039 = vmatpush1.bf16.msra.mxu0 0
        %2040 = vmatprep.subr.bf16.mxu0 0
        %2041 = vmatpush1.bf16.msra.mxu0 0
        %2042 = vmatprep.subr.bf16.mxu0 0
        %2043 = vmatpush1.bf16.msra.mxu0 0
        %2044 = vmatprep.subr.bf16.mxu0 0
        %2045 = vmatpush1.bf16.msra.mxu0 0
        %2046 = vmatprep.subr.bf16.mxu0 0
        %2047 = vmatpush1.bf16.msra.mxu0 0
        %2048 = vmatprep.subr.bf16.mxu0 0
        %2049 = vmatpush1.bf16.msra.mxu0 0
        %2050 = vmatprep.subr.bf16.mxu0 0
        %2051 = vmatpush1.bf16.msra.mxu0 0
        %2052 = vmatprep.subr.bf16.mxu0 0
        %2053 = vmatpush1.bf16.msra.mxu0 0
        %2054 = vmatprep.subr.bf16.mxu0 0
        %2055 = vmatpush1.bf16.msra.mxu0 0
        %2056 = vmatprep.subr.bf16.mxu0 0
        %2057 = vmatpush1.bf16.msra.mxu0 0
        %2058 = vmatprep.mubr.bf16.mxu0 0
        %2059 = vmatmul.mubr.bf16.gmra.mrb[0].mxu0 %v2024
        %v2060 = vpop.f32.mrb[0].mxu0
        %v2061 = vadd.f32 %v2009, %v2060
        %v2062 = vpop.f32.mrb[0].mxu0
        %v2063 = vpop.f32.mrb[0].mxu0
        %v2064 = vpop.f32.mrb[0].mxu0
        %2065 = vdwg.mxu0
        %v2066 = vadd.f32 %v1280, %v2061
        %v2067 = vld [vmem:[%s1091] sm:$0x1]
        %v2068 = vld [vmem:[%s1099] sm:$0x1]
        %v2069 = vsel %vm1286, %v2066, 0.0
        %2070 = vadd.xlane.f32.xlu0 %v2069
        %v2071 = vpop.xlane.xlu0 %2070
        %v2072 = vmul.f32 %v2071, %v1290
        %v2073 = vsub.f32 %v2066, %v2072
        %v2074 = vmul.f32 %v2073, %v2073
        %v2075 = vsel %vm1286, %v2074, 0.0
        %2076 = vadd.xlane.f32.xlu0 %v2075
        %v2077 = vpop.xlane.xlu0 %2076
        %v2078 = vmul.f32 %v2077, 0.032258064
        %v2079 = vrsqrt.pop %v2078
        %v2080 = vmul.f32 %v2078, %v2079
        %vm2081 = vcmp.eq.f32.partialorder %v2078, inf
        %v2082 = vsel %vm2081, %v2078, %v2080
        %vm2083 = vcmp.eq.f32.partialorder %v2078, 0.0
        %v2084 = vand.u32 %v2078, 2147483648
        %v2085 = vsel %vm2083, %v2084, %v2082
        %v2086 = vadd.f32 %v2085, 1e-06
        %v2087 = vrcp.pop %v2086
        %v2089 = vlaneseq
        %v2090 = vshrl.u32 %v2089, 7
        %v2091 = vsub.s32 0, %v2090
        %v2092 = vrot.slane %v2067, %v2091
        %v2094 = vmul.f32 %v2092, %v2073
        %v2095 = vmul.f32 %v2094, %v2087
        %v2097 = vlaneseq
        %v2098 = vshrl.u32 %v2097, 7
        %v2099 = vsub.s32 0, %v2098
        %v2100 = vrot.slane %v2068, %v2099
        %v2102 = vadd.f32 %v2095, %v2100
        %v2103 = vpack.c.bf16 %v2102, %v2102
        %v2104 = vld [vmem:[%s1108] sm:$0xf]
        %v2105 = vld [vmem:[%s1108 + $0x4] sm:$0xf]
        %v2106 = vld [vmem:[%s1108 + $0x8] sm:$0xf]
        %v2107 = vld [vmem:[%s1108 + $0xc] sm:$0xf]
        %v2108 = vld [vmem:[%s1116] sm:$0x1]
        %v2110 = vlaneseq
        %v2111 = vshrl.u32 %v2110, 7
        %v2112 = vsub.s32 0, %v2111
        %v2113 = vrot.slane %v2108, %v2112
        %v2119 = vunpack.c.l.b16 %v2104
        %v2120 = vunpack.c.l.b16 %v2105
        %v2121 = vunpack.c.l.b16 %v2106
        %v2122 = vunpack.c.l.b16 %v2107
        %v2123 = vpack.c.b16 %v2120, %v2119
        %v2124 = vpack.c.b16 %v2122, %v2121
        %v2128 = vsel %vm1286, %v2103, 0
        %2130 = vmatprep.subr.bf16.mxu0 0
        %2131 = vmatpush1.bf16.msra.mxu0 %v2123
        %2132 = vmatprep.subr.bf16.mxu0 0
        %2133 = vmatpush1.bf16.msra.mxu0 %v2124
        %2134 = vmatprep.subr.bf16.mxu0 0
        %2135 = vmatpush1.bf16.msra.mxu0 0
        %2136 = vmatprep.subr.bf16.mxu0 0
        %2137 = vmatpush1.bf16.msra.mxu0 0
        %2138 = vmatprep.subr.bf16.mxu0 0
        %2139 = vmatpush1.bf16.msra.mxu0 0
        %2140 = vmatprep.subr.bf16.mxu0 0
        %2141 = vmatpush1.bf16.msra.mxu0 0
        %2142 = vmatprep.subr.bf16.mxu0 0
        %2143 = vmatpush1.bf16.msra.mxu0 0
        %2144 = vmatprep.subr.bf16.mxu0 0
        %2145 = vmatpush1.bf16.msra.mxu0 0
        %2146 = vmatprep.subr.bf16.mxu0 0
        %2147 = vmatpush1.bf16.msra.mxu0 0
        %2148 = vmatprep.subr.bf16.mxu0 0
        %2149 = vmatpush1.bf16.msra.mxu0 0
        %2150 = vmatprep.subr.bf16.mxu0 0
        %2151 = vmatpush1.bf16.msra.mxu0 0
        %2152 = vmatprep.subr.bf16.mxu0 0
        %2153 = vmatpush1.bf16.msra.mxu0 0
        %2154 = vmatprep.subr.bf16.mxu0 0
        %2155 = vmatpush1.bf16.msra.mxu0 0
        %2156 = vmatprep.subr.bf16.mxu0 0
        %2157 = vmatpush1.bf16.msra.mxu0 0
        %2158 = vmatprep.subr.bf16.mxu0 0
        %2159 = vmatpush1.bf16.msra.mxu0 0
        %2160 = vmatprep.subr.bf16.mxu0 0
        %2161 = vmatpush1.bf16.msra.mxu0 0
        %2162 = vmatprep.mubr.bf16.mxu0 0
        %2163 = vmatmul.mubr.bf16.gmra.mrb[0].mxu0 %v2128
        %v2164 = vpop.f32.mrb[0].mxu0
        %v2165 = vadd.f32 %v2113, %v2164
        %v2166 = vpop.f32.mrb[0].mxu0
        %v2167 = vpop.f32.mrb[0].mxu0
        %v2168 = vpop.f32.mrb[0].mxu0
        %2169 = vdwg.mxu0
        %v2170 = vpack.c.bf16 %v2165, %v2165
        %v2171 = vld [vmem:[%s1125] sm:$0xf]
        %v2172 = vld [vmem:[%s1125 + $0x4] sm:$0xf]
        %v2173 = vld [vmem:[%s1125 + $0x8] sm:$0xf]
        %v2174 = vld [vmem:[%s1125 + $0xc] sm:$0xf]
        %v2175 = vld [vmem:[%s1125 + $0x10] sm:$0xf]
        %v2176 = vld [vmem:[%s1125 + $0x14] sm:$0xf]
        %v2177 = vld [vmem:[%s1125 + $0x18] sm:$0xf]
        %v2178 = vld [vmem:[%s1125 + $0x1c] sm:$0xf]
        %v2179 = vld [vmem:[%s1133] sm:$0x1]
        %v2181 = vlaneseq
        %v2182 = vshrl.u32 %v2181, 7
        %v2183 = vsub.s32 0, %v2182
        %v2184 = vrot.slane %v2179, %v2183
        %v2194 = vunpack.c.l.b16 %v2171
        %v2195 = vunpack.c.l.b16 %v2172
        %v2196 = vunpack.c.l.b16 %v2173
        %v2197 = vunpack.c.l.b16 %v2174
        %v2198 = vunpack.c.l.b16 %v2175
        %v2199 = vunpack.c.l.b16 %v2176
        %v2200 = vunpack.c.l.b16 %v2177
        %v2201 = vunpack.c.l.b16 %v2178
        %v2202 = vpack.c.b16 %v2195, %v2194
        %v2203 = vpack.c.b16 %v2197, %v2196
        %v2204 = vpack.c.b16 %v2199, %v2198
        %v2205 = vpack.c.b16 %v2201, %v2200
        %vm2210 = vcmask 523264
        %v2212 = vsel %vm2210, %v2170, 0
        %2214 = vmatprep.subr.bf16.mxu0 0
        %2215 = vmatpush1.bf16.msra.mxu0 %v2202
        %2216 = vmatprep.subr.bf16.mxu0 0
        %2217 = vmatpush1.bf16.msra.mxu0 %v2203
        %2218 = vmatprep.subr.bf16.mxu0 0
        %2219 = vmatpush1.bf16.msra.mxu0 %v2204
        %2220 = vmatprep.subr.bf16.mxu0 0
        %2221 = vmatpush1.bf16.msra.mxu0 %v2205
        %2222 = vmatprep.subr.bf16.mxu0 0
        %2223 = vmatpush1.bf16.msra.mxu0 0
        %2224 = vmatprep.subr.bf16.mxu0 0
        %2225 = vmatpush1.bf16.msra.mxu0 0
        %2226 = vmatprep.subr.bf16.mxu0 0
        %2227 = vmatpush1.bf16.msra.mxu0 0
        %2228 = vmatprep.subr.bf16.mxu0 0
        %2229 = vmatpush1.bf16.msra.mxu0 0
        %2230 = vmatprep.subr.bf16.mxu0 0
        %2231 = vmatpush1.bf16.msra.mxu0 0
        %2232 = vmatprep.subr.bf16.mxu0 0
        %2233 = vmatpush1.bf16.msra.mxu0 0
        %2234 = vmatprep.subr.bf16.mxu0 0
        %2235 = vmatpush1.bf16.msra.mxu0 0
        %2236 = vmatprep.subr.bf16.mxu0 0
        %2237 = vmatpush1.bf16.msra.mxu0 0
        %2238 = vmatprep.subr.bf16.mxu0 0
        %2239 = vmatpush1.bf16.msra.mxu0 0
        %2240 = vmatprep.subr.bf16.mxu0 0
        %2241 = vmatpush1.bf16.msra.mxu0 0
        %2242 = vmatprep.subr.bf16.mxu0 0
        %2243 = vmatpush1.bf16.msra.mxu0 0
        %2244 = vmatprep.subr.bf16.mxu0 0
        %2245 = vmatpush1.bf16.msra.mxu0 0
        %2246 = vmatprep.mubr.bf16.mxu0 0
        %2247 = vmatmul.mubr.bf16.gmra.mrb[0].mxu0 %v2212
        %v2248 = vpop.f32.mrb[0].mxu0
        %v2249 = vadd.f32 %v2184, %v2248
        %v2250 = vpop.f32.mrb[0].mxu0
        %v2251 = vpop.f32.mrb[0].mxu0
        %v2252 = vpop.f32.mrb[0].mxu0
        %2253 = vdwg.mxu0
        %v2254 = vadd.f32 %v2066, %v2249
        %2255 = vst.msk [vmem:[#allocation2] sm:$0xff] %vm1286, %v2254
        %p2256 = scmp.eq.s32.totalorder %s70, 1
        // Predicated region
        $region185: #{tpu_custom_call.1} parent=99 // pred_check
          %p2257 = pneg %p2256
        $region186: #{tpu_custom_call.1} parent=99 // pred_check_branch
          %2259 = sbr.rel (%p2257) target = $region188
        $region187: #{tpu_custom_call.1} parent=99 // pred_region
          %v2260 = vld [vmem:[#allocation32] sm:$0x1]
          %v2261 = vld [vmem:[#allocation33] sm:$0x1]
          %v2262 = vsel %vm1286, %v2254, 0.0
          %2263 = vadd.xlane.f32.xlu0 %v2262
          %v2264 = vpop.xlane.xlu0 %2263
          %v2265 = vmul.f32 %v2264, %v1290
          %v2266 = vsub.f32 %v2254, %v2265
          %v2267 = vmul.f32 %v2266, %v2266
          %v2268 = vsel %vm1286, %v2267, 0.0
          %2269 = vadd.xlane.f32.xlu0 %v2268
          %v2270 = vpop.xlane.xlu0 %2269
          %v2271 = vmul.f32 %v2270, 0.032258064
          %v2272 = vrsqrt.pop %v2271
          %v2273 = vmul.f32 %v2271, %v2272
          %vm2274 = vcmp.eq.f32.partialorder %v2271, inf
          %v2275 = vsel %vm2274, %v2271, %v2273
          %vm2276 = vcmp.eq.f32.partialorder %v2271, 0.0
          %v2277 = vand.u32 %v2271, 2147483648
          %v2278 = vsel %vm2276, %v2277, %v2275
          %v2279 = vadd.f32 %v2278, 1e-06
          %v2280 = vrcp.pop %v2279
          %v2282 = vlaneseq
          %v2283 = vshrl.u32 %v2282, 7
          %v2284 = vsub.s32 0, %v2283
          %v2285 = vrot.slane %v2260, %v2284
          %v2287 = vmul.f32 %v2285, %v2266
          %v2288 = vmul.f32 %v2287, %v2280
          %v2290 = vlaneseq
          %v2291 = vshrl.u32 %v2290, 7
          %v2292 = vsub.s32 0, %v2291
          %v2293 = vrot.slane %v2261, %v2292
          %v2295 = vadd.f32 %v2288, %v2293
          %2296 = vst.msk [vmem:[%s1271] sm:$0xff] %vm1286, %v2295
        $region188: #{tpu_custom_call.1} parent=99 // pred_fallthru
          _
        %s2297 = sand.u32 %s595, 1
        %s2298 = scalar_lea.sflag [#allocation5], %s2297
        %s2299 = sand.u32 %s595, 1
        %s2300 = smul.addr %s2299, 8
        %s2301 = scalar_lea.vmem [#allocation35], %s2300
        // Predicated region
        $region189: #{tpu_custom_call.1} parent=99 // pred_check
          %p2302 = pneg %p605
        $region190: #{tpu_custom_call.1} parent=99 // pred_check_branch
          %2304 = sbr.rel (%p2302) target = $region192
        $region191: #{tpu_custom_call.1} parent=99 // pred_region
          %s2306 = ssub.s32 128, 128
          %2307 = vsyncadd %s2298, %s2306
          %s2308 = smul.addr %s69, 128
          %s2309 = scalar_lea.hbm %s20, %s2308
          %s2311 = sshll.u32 %s2301, 4
          %s2312 = int_to_ptr.vmem [resolvable:$true] %s2311
          %2314 = dma.vmem_to_hbm [thread:$0]  %s2312, 128, %s2309, %s2298
        $region192: #{tpu_custom_call.1} parent=99 // pred_fallthru
          _
      $region100: #{tpu_custom_call.1} parent=5 // pred_fallthru
        _
      %p2315 = scmp.le.s32.totalorder 2, %s60
      // Predicated region
      $region193: #{tpu_custom_call.1} parent=5 // pred_check
        %p2316 = pneg %p2315
      $region194: #{tpu_custom_call.1} parent=5 // pred_check_branch
        %2318 = sbr.rel (%p2316) target = $region196
      $region195: #{tpu_custom_call.1} parent=5 // pred_region
        %s2319 = ssub.s32 %s60, 2
        // Predicated region
        $region197: #{tpu_custom_call.1} parent=195 // pred_check
          %p2320 = pneg %p611
        $region198: #{tpu_custom_call.1} parent=195 // pred_check_branch
          %2322 = sbr.rel (%p2320) target = $region200
        $region199: #{tpu_custom_call.1} parent=195 // pred_region
          %s2323 = sand.u32 %s596, 1
          %s2324 = scalar_lea.sflag [#allocation5], %s2323
          %s2325 = sand.u32 %s596, 1
          %s2326 = smul.addr %s2325, 8
          %s2327 = scalar_lea.vmem [#allocation35], %s2326
          %2328 = dma.done %s2324, 128
        $region200: #{tpu_custom_call.1} parent=195 // pred_fallthru
          _
      $region196: #{tpu_custom_call.1} parent=5 // pred_fallthru
        _
    $region6: #{tpu_custom_call.1} parent=1 // loop_footer
      %s64 = sadd.s32 1, %s60
    $region7: #{tpu_custom_call.1} parent=1 // loop_footer_branch
      %59 = sbr.rel target = $region3
    $region8: #{tpu_custom_call.1} parent=1 // loop_exit
      _
    %2329 = vsyncpa [#allocation4], 1
    %s2330 = scalar_lea.sflag [#allocation4], 1
    %2331 = vsyncpa %s2330, 1
    %2332 = vsyncpa [#allocation7], 1
    %s2333 = scalar_lea.sflag [#allocation7], 1
    %2334 = vsyncpa %s2333, 1
    %2335 = vsyncpa [#allocation10], 1
    %s2336 = scalar_lea.sflag [#allocation10], 1
    %2337 = vsyncpa %s2336, 1
    %2338 = vsyncpa [#allocation13], 1
    %s2339 = scalar_lea.sflag [#allocation13], 1
    %2340 = vsyncpa %s2339, 1
    %2341 = vsyncpa [#allocation16], 1
    %s2342 = scalar_lea.sflag [#allocation16], 1
    %2343 = vsyncpa %s2342, 1
    %2344 = vsyncpa [#allocation19], 1
    %s2345 = scalar_lea.sflag [#allocation19], 1
    %2346 = vsyncpa %s2345, 1
    %2347 = vsyncpa [#allocation22], 1
    %s2348 = scalar_lea.sflag [#allocation22], 1
    %2349 = vsyncpa %s2348, 1
    %2350 = vsyncpa [#allocation25], 1
    %s2351 = scalar_lea.sflag [#allocation25], 1
    %2352 = vsyncpa %s2351, 1
    %2353 = vsyncpa [#allocation28], 1
    %s2354 = scalar_lea.sflag [#allocation28], 1
    %2355 = vsyncpa %s2354, 1
    %2356 = vsyncpa [#allocation31], 1
    %s2357 = scalar_lea.sflag [#allocation31], 1
    %2358 = vsyncpa %s2357, 1
    %2359 = vsyncpa [#allocation34], 1
    %2360 = vsyncpa [#allocation5], 1
    %s2361 = scalar_lea.sflag [#allocation5], 1
    %2362 = vsyncpa %s2361, 1

</llo_original>
